<compile_context>
chip_gen: v6e
topology: v6e:2x2x1
jax: 0.10.0
libtpu: 0.0.40
codegen_flags: <defaults>
</compile_context>

<pallas_src>
import functools

import jax
import jax.numpy as jnp
from jax.experimental import pallas as pl
from jax.experimental.pallas import tpu as pltpu

_EPS = 1e-5
_VMEM_LIMIT = 32 * 1024 * 1024    # scoped-VMEM cap valid on v5e/v6e/v7x
_VMEM_BUDGET = 24 * 1024 * 1024   # per-step working-set target for tile picking


def _round_up(x, m):
    return (x + m - 1) // m * m


def _pick_tiles(R, Cp_in, Cp_out, kkc, mbytes, row_tile, row_tile3):
    """Decoupled row tiles for pass 2 / pass 3 + core-split + padded row count."""
    # pass 3: (tm3, Cp_in) in + (tm3, kkc) out, double-buffered, + w2f x2 buffers
    w3 = 2 * Cp_in * kkc * mbytes
    per_row3 = 2 * (Cp_in * mbytes + kkc * mbytes)
    cap3 = row_tile3 if row_tile3 is not None else (256 if Cp_in >= 512 else 512)
    tm3 = min(cap3, max(32, (_VMEM_BUDGET - w3) // per_row3))
    tm3 = min(tm3, _round_up(R, 32))
    tm3 = max(32, (tm3 // 32) * 32)

    # pass 2: x(f32) in + z,r out, double-buffered, + w1,wu x2 buffers
    w2p = 2 * (Cp_in * Cp_in + Cp_in * Cp_out) * mbytes
    per_row2 = 2 * (Cp_in * 4 + Cp_in * mbytes + Cp_out * mbytes)
    cap2 = row_tile if row_tile is not None else 2048
    tm2 = min(cap2, max(32, (_VMEM_BUDGET - w2p) // per_row2), _round_up(R, tm3))
    tm2 = max(tm3, (tm2 // tm3) * tm3)          # tm3 | tm2 -> shared R padding

    ncs = 2 if R >= 2 * tm2 else 1              # leading 'parallel' core split
    R_pad = _round_up(R, tm2 * ncs)
    return tm2, tm3, ncs, R_pad


# ---------------------------------------------------------------------------
# Pass 2: h1 = relu(bn1(x));  z = h1 @ w1 (conv1, 1x1);  r = x @ (a*wu)
# (residual 1x1 projection); fused sum / sum-sq of z (bn2 batch statistics,
# per-core partial accumulators, f32).  Grid = (core_split, row_tiles).
# ---------------------------------------------------------------------------
def _stage2_kernel(x_ref, scale1_ref, shift1_ref, w1_ref, wu_ref,
                   z_ref, r_ref, sum2_ref, ssq2_ref):
    @pl.when(pl.program_id(1) == 0)
    def _():
        sum2_ref[...] = jnp.zeros_like(sum2_ref)
        ssq2_ref[...] = jnp.zeros_like(ssq2_ref)

    x = x_ref[...]
    h = jnp.maximum(x * scale1_ref[...] + shift1_ref[...], 0.0)
    z = jnp.dot(h.astype(w1_ref.dtype), w1_ref[...],
                preferred_element_type=jnp.float32)
    z_ref[...] = z.astype(z_ref.dtype)
    r_ref[...] = jnp.dot(x.astype(wu_ref.dtype), wu_ref[...],
                         preferred_element_type=jnp.float32).astype(r_ref.dtype)
    sum2_ref[...] += jnp.sum(z, axis=0, keepdims=True)[None]
    ssq2_ref[...] += jnp.sum(z * z, axis=0, keepdims=True)[None]


# ---------------------------------------------------------------------------
# Pass 3: h2 = relu(bn2(z)); all K*K transposed-conv tap matmuls at once:
#   taps[r, (kh*K+kw)*Cout + co] = sum_ci h2[r, ci] * (b * w2)[ci, co, kh, kw]
# ---------------------------------------------------------------------------
def _stage3_kernel(z_ref, scale2_ref, shift2_ref, w2_ref, taps_ref):
    h = jnp.maximum(z_ref[...].astype(jnp.float32) * scale2_ref[...]
                    + shift2_ref[...], 0.0)
    taps_ref[...] = jnp.dot(h.astype(w2_ref.dtype), w2_ref[...],
                            preferred_element_type=jnp.float32
                            ).astype(taps_ref.dtype)


@functools.partial(
    jax.jit,
    static_argnames=("kernelsize", "stride", "padding", "dilation",
                     "o_padding", "a", "b", "row_tile", "row_tile3",
                     "matmul_dtype"))
def residual_block_forward(x_nchw, params, *, kernelsize, stride, padding,
                           dilation, o_padding, a=1.0, b=1.0,
                           row_tile=None, row_tile3=None,
                           matmul_dtype=jnp.bfloat16):
    """Forward pass.  x_nchw: (N, C_in, H, W) f32 -> (N, C_out, Ho, Wo) f32."""
    K, s, p, d, op = kernelsize, stride, padding, dilation, o_padding
    N, C_in, H, W = x_nchw.shape
    C_out = params["w2"].shape[1]

    Ho = (H - 1) * s - 2 * p + d * (K - 1) + op + 1
    Wo = (W - 1) * s - 2 * p + d * (K - 1) + op + 1
    op_u = Ho - ((H - 1) * s + 1)    # output_padding of the 1x1 upsample conv
    assert op_u >= 0, "canonical 1x1 upsample conv cannot match this geometry"

    # lane-dense channel padding (real networks use C >= 128; tiny C wastes MXU
    # but stays correct)
    Cp_in = _round_up(C_in, 128)
    Cp_out = _round_up(C_out, 128)
    kkc = K * K * Cp_out

    f32 = jnp.float32
    mdt = matmul_dtype
    mbytes = jnp.dtype(mdt).itemsize

    R = N * H * W
    tm2, tm3, ncs, R_pad = _pick_tiles(R, Cp_in, Cp_out, kkc, mbytes,
                                       row_tile, row_tile3)
    Rc = (R_pad // tm2) // ncs       # row tiles per core for pass 2
    Rt3 = R_pad // tm3

    # ---- layout + bn1 statistics (fused by XLA with the transpose/pad) ----
    x2d_r = jnp.transpose(x_nchw, (0, 2, 3, 1)).astype(f32).reshape(R, C_in)
    sum1 = jnp.pad(jnp.sum(x2d_r, axis=0), (0, Cp_in - C_in)).reshape(1, Cp_in)
    ssq1 = jnp.pad(jnp.sum(x2d_r * x2d_r, axis=0),
                   (0, Cp_in - C_in)).reshape(1, Cp_in)
    x2d = jnp.pad(x2d_r, ((0, R_pad - R), (0, Cp_in - C_in)))

    def pad_vec(v, n, fill):
        v = v.astype(f32).reshape(-1)
        return jnp.pad(v, (0, n - v.shape[0]),
                       constant_values=fill).reshape(1, n)

    g1 = pad_vec(params["gamma1"], Cp_in, 1.0)
    b1 = pad_vec(params["beta1"], Cp_in, 0.0)
    g2 = pad_vec(params["gamma2"], Cp_in, 1.0)
    b2 = pad_vec(params["beta2"], Cp_in, 0.0)

    # weights: fold the a / b combine scalars in, pad lane-dense, cast to mdt
    w1 = jnp.pad(params["w1"][:, :, 0, 0].astype(f32),
                 ((0, Cp_in - C_in), (0, Cp_in - C_in))).astype(mdt)
    wu = jnp.pad(params["wu"][:, :, 0, 0].astype(f32) * a,
                 ((0, Cp_in - C_in), (0, Cp_out - C_out))).astype(mdt)
    w2t = jnp.transpose(params["w2"].astype(f32) * b, (0, 2, 3, 1))  # Ci,K,K,Co
    w2t = jnp.pad(w2t, ((0, Cp_in - C_in), (0, 0), (0, 0), (0, Cp_out - C_out)))
    w2f = w2t.reshape(Cp_in, kkc).astype(mdt)

    def affine(sum_, ssq, gamma, beta):
        mean = sum_ / R
        var = jnp.maximum(ssq / R - mean * mean, 0.0)   # biased batch variance
        scale = gamma * jax.lax.rsqrt(var + _EPS)
        return scale, beta - mean * scale

    scale1, shift1 = affine(sum1, ssq1, g1, b1)

    vec_spec2 = pl.BlockSpec((1, Cp_in), lambda c, i: (0, 0))
    row_out2 = lambda c, i: (c * Rc + i, 0)
    stat_spec = pl.BlockSpec((1, 1, Cp_in), lambda c, i: (c, 0, 0))

    # ---- pass 2: bn1 -> relu -> conv1, residual projection, bn2 stats ----
    # TODO(synk): constant-index weight blocks could be single-buffered
    # (pipeline_mode=pl.Buffered(1)) to free VMEM on large channel counts.
    z2d, r2d, sum2_p, ssq2_p = pl.pallas_call(
        _stage2_kernel,
        grid=(ncs, Rc),
        in_specs=[pl.BlockSpec((tm2, Cp_in), row_out2),
                  vec_spec2, vec_spec2,
                  pl.BlockSpec((Cp_in, Cp_in), lambda c, i: (0, 0)),
                  pl.BlockSpec((Cp_in, Cp_out), lambda c, i: (0, 0))],
        out_specs=(pl.BlockSpec((tm2, Cp_in), row_out2),
                   pl.BlockSpec((tm2, Cp_out), row_out2),
                   stat_spec, stat_spec),
        out_shape=(jax.ShapeDtypeStruct((R_pad, Cp_in), mdt),
                   jax.ShapeDtypeStruct((R_pad, Cp_out), mdt),
                   jax.ShapeDtypeStruct((ncs, 1, Cp_in), f32),
                   jax.ShapeDtypeStruct((ncs, 1, Cp_in), f32)),
        compiler_params=pltpu.CompilerParams(
            dimension_semantics=("parallel", "arbitrary"),
            vmem_limit_bytes=_VMEM_LIMIT),
        cost_estimate=pl.CostEstimate(
            flops=2 * R_pad * Cp_in * (Cp_in + Cp_out) + 8 * R_pad * Cp_in,
            transcendentals=0,
            bytes_accessed=(R_pad * Cp_in * 4
                            + (Cp_in * Cp_in + Cp_in * Cp_out) * mbytes
                            + R_pad * (Cp_in + Cp_out) * mbytes
                            + 4 * ncs * Cp_in * 4)),
    )(x2d, scale1, shift1, w1, wu)

    # reduce per-core partials; analytic correction for padded rows (each
    # padded row of x is all-zero, so its conv1 output is relu(shift1) @ w1)
    sum2 = jnp.sum(sum2_p[:, 0, :], axis=0, keepdims=True)
    ssq2 = jnp.sum(ssq2_p[:, 0, :], axis=0, keepdims=True)
    pad_rows = R_pad - R
    if pad_rows:
        z_pad = jnp.dot(jnp.maximum(shift1, 0.0).astype(mdt), w1,
                        preferred_element_type=f32)
        sum2 = sum2 - pad_rows * z_pad
        ssq2 = ssq2 - pad_rows * (z_pad * z_pad)

    scale2, shift2 = affine(sum2, ssq2, g2, b2)

    # ---- pass 3: bn2 -> relu -> all K*K transposed-conv tap matmuls ----
    vec_spec3 = pl.BlockSpec((1, Cp_in), lambda i: (0, 0))
    taps2d = pl.pallas_call(
        _stage3_kernel,
        grid=(Rt3,),
        in_specs=[pl.BlockSpec((tm3, Cp_in), lambda i: (i, 0)),
                  vec_spec3, vec_spec3,
                  pl.BlockSpec((Cp_in, kkc), lambda i: (0, 0))],
        out_specs=pl.BlockSpec((tm3, kkc), lambda i: (i, 0)),
        out_shape=jax.ShapeDtypeStruct((R_pad, kkc), mdt),
        compiler_params=pltpu.CompilerParams(
            dimension_semantics=("parallel",),     # megacore-shardable
            vmem_limit_bytes=_VMEM_LIMIT),
        cost_estimate=pl.CostEstimate(
            flops=2 * R_pad * Cp_in * kkc + 6 * R_pad * Cp_in,
            transcendentals=0,
            bytes_accessed=(R_pad * Cp_in * mbytes + Cp_in * kkc * mbytes
                            + R_pad * kkc * mbytes + 4 * Cp_in * 4)),
    )(z2d, scale2, shift2, w2f)

    # ---- glue: strided scatter-add of tap slabs + crop + in-place residual --
    # Lane padding is sliced off first, so the scatter only moves C_out
    # channels; a/b were folded into the weights, so no full-output rescale.
    taps = taps2d[:R].reshape(N, H, W, K, K, Cp_out)[..., :C_out].astype(f32)
    r3 = r2d[:R].reshape(N, H, W, Cp_out)[..., :C_out].astype(f32)

    Hf = (H - 1) * s + d * (K - 1) + 1 + op
    Wf = (W - 1) * s + d * (K - 1) + 1 + op
    canvas = jnp.zeros((N, Hf, Wf, C_out), f32)
    for kh in range(K):
        for kw in range(K):
            canvas = canvas.at[:, kh * d: kh * d + (H - 1) * s + 1: s,
                                  kw * d: kw * d + (W - 1) * s + 1: s, :].add(
                taps[:, :, :, kh, kw, :])
    out = canvas[:, p:p + Ho, p:p + Wo, :]
    out = out.at[:, 0:(H - 1) * s + 1: s, 0:(W - 1) * s + 1: s, :].add(r3)
    # TODO(synk): a fully in-kernel phase-decomposed (sub-pixel) scatter would
    # also remove this tap-slab HBM round trip (needs halo row DMA in pass 3).
    return jnp.transpose(out, (0, 3, 1, 2))        # back to NCHW


# ---------------------------------------------------------------------------
# Pure-JAX f32 reference (scatter formulation of ConvTranspose2d).
# ---------------------------------------------------------------------------
def _ref_conv_transpose_nhwc(x, w_pt, stride, padding, dilation, out_pad):
    N, H, W, Ci = x.shape
    _, Co, Kh, Kw = w_pt.shape
    Ho = (H - 1) * stride - 2 * padding + dilation * (Kh - 1) + out_pad + 1
    Wo = (W - 1) * stride - 2 * padding + dilation * (Kw - 1) + out_pad + 1
    Hf = (H - 1) * stride + dilation * (Kh - 1) + 1 + out_pad
    Wf = (W - 1) * stride + dilation * (Kw - 1) + 1 + out_pad
    full = jnp.zeros((N, Hf, Wf, Co), jnp.float32)
    for kh in range(Kh):
        for kw in range(Kw):
            contrib = jnp.einsum("nhwi,io->nhwo", x, w_pt[:, :, kh, kw])
            full = full.at[:, kh * dilation:kh * dilation + (H - 1) * stride + 1:stride,
                              kw * dilation:kw * dilation + (W - 1) * stride + 1:stride, :].add(contrib)
    return full[:, padding:padding + Ho, padding:padding + Wo, :]


def reference_forward(x_nchw, params, *, kernelsize, stride, padding,
                      dilation, o_padding, a, b):
    eps = 1e-5
    x = jnp.transpose(x_nchw, (0, 2, 3, 1)).astype(jnp.float32)

    def bn(v, g, be):
        m = jnp.mean(v, axis=(0, 1, 2), keepdims=True)
        var = jnp.mean((v - m) ** 2, axis=(0, 1, 2), keepdims=True)
        return (v - m) * jax.lax.rsqrt(var + eps) * g + be

    h = jnp.maximum(bn(x, params["gamma1"], params["beta1"]), 0.0)
    h = jnp.einsum("nhwi,io->nhwo", h, params["w1"][:, :, 0, 0])
    h = jnp.maximum(bn(h, params["gamma2"], params["beta2"]), 0.0)
    out = _ref_conv_transpose_nhwc(h, params["w2"], stride, padding, dilation,
                                   o_padding)
    Ho = out.shape[1]
    op_u = Ho - ((x.shape[1] - 1) * stride + 1)
    res = _ref_conv_transpose_nhwc(x, params["wu"], stride, 0, 1, op_u)
    y = a * res + b * out
    return jnp.transpose(y, (0, 3, 1, 2))


if __name__ == "__main__":
    N, C_in, C_out, H, W = 2, 4, 8, 16, 16
    kernelsize, stride, padding, dilation, o_padding = 3, 2, 1, 1, 1
    a, b = 0.5, 1.5

    key = jax.random.PRNGKey(0)
    k1, k2, k3, k4, k5 = jax.random.split(key, 5)
    params = {
        # PyTorch ConvTranspose2d weight layout: (in_channels, out_channels, kH, kW)
        "w1": jax.random.normal(k1, (C_in, C_in, 1, 1), jnp.float32) * 0.2,
        "w2": jax.random.normal(k2, (C_in, C_out, kernelsize, kernelsize),
                                jnp.float32) * 0.1,
        "wu": jax.random.normal(k3, (C_in, C_out, 1, 1), jnp.float32) * 0.2,
        "gamma1": 1.0 + 0.1 * jax.random.normal(k4, (C_in,), jnp.float32),
        "beta1": jnp.linspace(-0.1, 0.1, C_in, dtype=jnp.float32),
        "gamma2": 1.0 + 0.05 * jnp.arange(C_in, dtype=jnp.float32),
        "beta2": jnp.linspace(0.1, -0.1, C_in, dtype=jnp.float32),
    }
    x = jax.random.normal(k5, (N, C_in, H, W), jnp.float32)

    common = dict(kernelsize=kernelsize, stride=stride, padding=padding,
                  dilation=dilation, o_padding=o_padding, a=a, b=b)

    # f32 matmul/storage path with small forced tiles: exercises the 2-core
    # row split, decoupled pass-2/pass-3 tiles, cross-tile bn2-stat
    # accumulation and the padded-row analytic correction (R=512 -> R_pad=768).
    out_f32 = jax.block_until_ready(residual_block_forward(
        x, params, row_tile=192, row_tile3=96, matmul_dtype=jnp.float32,
        **common))
    # bf16 matmul + bf16 intermediates, same forced tiling.
    out_bf16 = jax.block_until_ready(residual_block_forward(
        x, params, row_tile=192, row_tile3=96, matmul_dtype=jnp.bfloat16,
        **common))
    # Default (auto-tiled) configuration.
    out_auto = jax.block_until_ready(residual_block_forward(
        x, params, **common))

    ref = jax.block_until_ready(reference_forward(x, params, **common))

    assert out_f32.shape == (N, C_out, 2 * H, 2 * W), out_f32.shape
    assert out_bf16.shape == (N, C_out, 2 * H, 2 * W), out_bf16.shape
    assert out_auto.shape == (N, C_out, 2 * H, 2 * W), out_auto.shape
    err_f32 = float(jnp.max(jnp.abs(out_f32 - ref)))
    err_bf16 = float(jnp.max(jnp.abs(out_bf16 - ref)))
    err_auto = float(jnp.max(jnp.abs(out_auto - ref)))
    scale = 1.0 + float(jnp.max(jnp.abs(ref)))
    assert err_f32 < 5e-4, f"f32 path max abs error {err_f32}"
    assert err_bf16 < 5e-2 * scale, f"bf16 path max abs error {err_bf16}"
    assert err_auto < 5e-2 * scale, f"auto path max abs error {err_auto}"
    print("KERNEL_OK")
</pallas_src>

<mosaic_0001>
module attributes {stable_mosaic.version = 11 : i64} {
  func.func @_stage2_kernel(%arg0: i32, %arg1: i32, %arg2: memref<192x128xf32, #tpu.memory_space<vmem>>, %arg3: memref<1x128xf32, #tpu.memory_space<vmem>>, %arg4: memref<1x128xf32, #tpu.memory_space<vmem>>, %arg5: memref<128x128xf32, #tpu.memory_space<vmem>>, %arg6: memref<128x128xf32, #tpu.memory_space<vmem>>, %arg7: memref<192x128xf32, #tpu.memory_space<vmem>>, %arg8: memref<192x128xf32, #tpu.memory_space<vmem>>, %arg9: memref<1x1x128xf32, #tpu.memory_space<vmem>>, %arg10: memref<1x1x128xf32, #tpu.memory_space<vmem>>) attributes {dimension_semantics = [#tpu.dimension_semantics<parallel>, #tpu.dimension_semantics<arbitrary>], iteration_bounds = array<i64: 2, 2>, scalar_prefetch = 0 : i64, scratch_operands = 0 : i64, tpu.core_type = #tpu.core_type<tc>, window_params = [{transform_indices = @transform_0, window_bounds = array<i64: 192, 128>}, {pipeline_mode = #tpu.pipeline_mode<synchronous>, transform_indices = @transform_1, window_bounds = array<i64: 1, 128>}, {pipeline_mode = #tpu.pipeline_mode<synchronous>, transform_indices = @transform_2, window_bounds = array<i64: 1, 128>}, {pipeline_mode = #tpu.pipeline_mode<synchronous>, transform_indices = @transform_3, window_bounds = array<i64: 128, 128>}, {pipeline_mode = #tpu.pipeline_mode<synchronous>, transform_indices = @transform_4, window_bounds = array<i64: 128, 128>}, {transform_indices = @transform_5, window_bounds = array<i64: 192, 128>}, {transform_indices = @transform_6, window_bounds = array<i64: 192, 128>}, {transform_indices = @transform_7, window_bounds = array<i64: 1, 1, 128>}, {transform_indices = @transform_8, window_bounds = array<i64: 1, 1, 128>}]} {
    %c0_i32 = arith.constant 0 : i32
    %0 = arith.cmpi eq, %arg1, %c0_i32 : i32
    %1 = arith.extui %0 : i1 to i32
    %c0_i32_0 = arith.constant 0 : i32
    %2 = arith.cmpi ne, %1, %c0_i32_0 : i32
    scf.if %2 {
      %cst_30 = arith.constant 0.000000e+00 : f32
      %31 = vector.broadcast %cst_30 : f32 to vector<1x1x128xf32>
      %c0_31 = arith.constant 0 : index
      %c0_32 = arith.constant 0 : index
      %c0_33 = arith.constant 0 : index
      %32 = vector.load %arg9[%c0_31, %c0_32, %c0_33] : memref<1x1x128xf32, #tpu.memory_space<vmem>>, vector<1x1x128xf32>
      tpu.vector_store %arg9[%c0_31, %c0_32, %c0_33], %31 {strides = array<i32>} : memref<1x1x128xf32, #tpu.memory_space<vmem>>, vector<1x1x128xf32>,
      %cst_34 = arith.constant 0.000000e+00 : f32
      %33 = vector.broadcast %cst_34 : f32 to vector<1x1x128xf32>
      %c0_35 = arith.constant 0 : index
      %c0_36 = arith.constant 0 : index
      %c0_37 = arith.constant 0 : index
      %34 = vector.load %arg10[%c0_35, %c0_36, %c0_37] : memref<1x1x128xf32, #tpu.memory_space<vmem>>, vector<1x1x128xf32>
      tpu.vector_store %arg10[%c0_35, %c0_36, %c0_37], %33 {strides = array<i32>} : memref<1x1x128xf32, #tpu.memory_space<vmem>>, vector<1x1x128xf32>,
    } else {
    }
    %c0 = arith.constant 0 : index
    %c0_1 = arith.constant 0 : index
    %3 = vector.load %arg2[%c0, %c0_1] : memref<192x128xf32, #tpu.memory_space<vmem>>, vector<192x128xf32>
    %c0_2 = arith.constant 0 : index
    %c0_3 = arith.constant 0 : index
    %4 = vector.load %arg3[%c0_2, %c0_3] : memref<1x128xf32, #tpu.memory_space<vmem>>, vector<1x128xf32>
    %5 = vector.broadcast %4 : vector<1x128xf32> to vector<192x128xf32>
    %6 = arith.mulf %3, %5 : vector<192x128xf32>
    %c0_4 = arith.constant 0 : index
    %c0_5 = arith.constant 0 : index
    %7 = vector.load %arg4[%c0_4, %c0_5] : memref<1x128xf32, #tpu.memory_space<vmem>>, vector<1x128xf32>
    %8 = vector.broadcast %7 : vector<1x128xf32> to vector<192x128xf32>
    %9 = arith.addf %6, %8 : vector<192x128xf32>
    %cst = arith.constant 0.000000e+00 : f32
    %10 = vector.broadcast %cst : f32 to vector<192x128xf32>
    %11 = arith.maximumf %9, %10 : vector<192x128xf32>
    %c0_6 = arith.constant 0 : index
    %c0_7 = arith.constant 0 : index
    %12 = vector.load %arg5[%c0_6, %c0_7] : memref<128x128xf32, #tpu.memory_space<vmem>>, vector<128x128xf32>
    %cst_8 = arith.constant dense<0.000000e+00> : vector<192x128xf32>
    %13 = tpu.matmul %11, %12, %cst_8 {dimension_numbers = #tpu.dot_dimension_numbers<[1], [0], [0], [1], [0, 0, 1, 1], [], []>} : vector<192x128xf32>, vector<128x128xf32>, vector<192x128xf32> -> vector<192x128xf32>
    %c0_9 = arith.constant 0 : index
    %c0_10 = arith.constant 0 : index
    %14 = vector.load %arg7[%c0_9, %c0_10] : memref<192x128xf32, #tpu.memory_space<vmem>>, vector<192x128xf32>
    tpu.vector_store %arg7[%c0_9, %c0_10], %13 {strides = array<i32>} : memref<192x128xf32, #tpu.memory_space<vmem>>, vector<192x128xf32>,
    %c0_11 = arith.constant 0 : index
    %c0_12 = arith.constant 0 : index
    %15 = vector.load %arg6[%c0_11, %c0_12] : memref<128x128xf32, #tpu.memory_space<vmem>>, vector<128x128xf32>
    %cst_13 = arith.constant dense<0.000000e+00> : vector<192x128xf32>
    %16 = tpu.matmul %3, %15, %cst_13 {dimension_numbers = #tpu.dot_dimension_numbers<[1], [0], [0], [1], [0, 0, 1, 1], [], []>} : vector<192x128xf32>, vector<128x128xf32>, vector<192x128xf32> -> vector<192x128xf32>
    %c0_14 = arith.constant 0 : index
    %c0_15 = arith.constant 0 : index
    %17 = vector.load %arg8[%c0_14, %c0_15] : memref<192x128xf32, #tpu.memory_space<vmem>>, vector<192x128xf32>
    tpu.vector_store %arg8[%c0_14, %c0_15], %16 {strides = array<i32>} : memref<192x128xf32, #tpu.memory_space<vmem>>, vector<192x128xf32>,
    %c0_16 = arith.constant 0 : index
    %c0_17 = arith.constant 0 : index
    %c0_18 = arith.constant 0 : index
    %18 = vector.load %arg9[%c0_16, %c0_17, %c0_18] : memref<1x1x128xf32, #tpu.memory_space<vmem>>, vector<1x1x128xf32>
    %cst_19 = arith.constant dense<0.000000e+00> : vector<128xf32>
    %19 = vector.multi_reduction <add>, %13, %cst_19 [0] : vector<192x128xf32> to vector<128xf32>
    %20 = vector.shape_cast %19 : vector<128xf32> to vector<1x128xf32>
    %21 = vector.shape_cast %20 : vector<1x128xf32> to vector<1x1x128xf32>
    %22 = arith.addf %18, %21 : vector<1x1x128xf32>
    %c0_20 = arith.constant 0 : index
    %c0_21 = arith.constant 0 : index
    %c0_22 = arith.constant 0 : index
    %23 = vector.load %arg9[%c0_20, %c0_21, %c0_22] : memref<1x1x128xf32, #tpu.memory_space<vmem>>, vector<1x1x128xf32>
    tpu.vector_store %arg9[%c0_20, %c0_21, %c0_22], %22 {strides = array<i32>} : memref<1x1x128xf32, #tpu.memory_space<vmem>>, vector<1x1x128xf32>,
    %c0_23 = arith.constant 0 : index
    %c0_24 = arith.constant 0 : index
    %c0_25 = arith.constant 0 : index
    %24 = vector.load %arg10[%c0_23, %c0_24, %c0_25] : memref<1x1x128xf32, #tpu.memory_space<vmem>>, vector<1x1x128xf32>
    %25 = arith.mulf %13, %13 : vector<192x128xf32>
    %cst_26 = arith.constant dense<0.000000e+00> : vector<128xf32>
    %26 = vector.multi_reduction <add>, %25, %cst_26 [0] : vector<192x128xf32> to vector<128xf32>
    %27 = vector.shape_cast %26 : vector<128xf32> to vector<1x128xf32>
    %28 = vector.shape_cast %27 : vector<1x128xf32> to vector<1x1x128xf32>
    %29 = arith.addf %24, %28 : vector<1x1x128xf32>
    %c0_27 = arith.constant 0 : index
    %c0_28 = arith.constant 0 : index
    %c0_29 = arith.constant 0 : index
    %30 = vector.load %arg10[%c0_27, %c0_28, %c0_29] : memref<1x1x128xf32, #tpu.memory_space<vmem>>, vector<1x1x128xf32>
    tpu.vector_store %arg10[%c0_27, %c0_28, %c0_29], %29 {strides = array<i32>} : memref<1x1x128xf32, #tpu.memory_space<vmem>>, vector<1x1x128xf32>,
    return
  }
  func.func @transform_0(%arg0: i32, %arg1: i32) -> (i32, i32) {
    %c2_i32 = arith.constant 2 : i32
    %0 = arith.muli %arg0, %c2_i32 : i32
    %1 = arith.addi %0, %arg1 : i32
    %c0_i32 = arith.constant 0 : i32
    %c0_i32_0 = arith.constant 0 : i32
    return %1, %c0_i32 : i32, i32
  }
  func.func @transform_1(%arg0: i32, %arg1: i32) -> (i32, i32) {
    %c0_i32 = arith.constant 0 : i32
    %c0_i32_0 = arith.constant 0 : i32
    %c0_i32_1 = arith.constant 0 : i32
    return %c0_i32, %c0_i32_0 : i32, i32
  }
  func.func @transform_2(%arg0: i32, %arg1: i32) -> (i32, i32) {
    %c0_i32 = arith.constant 0 : i32
    %c0_i32_0 = arith.constant 0 : i32
    %c0_i32_1 = arith.constant 0 : i32
    return %c0_i32, %c0_i32_0 : i32, i32
  }
  func.func @transform_3(%arg0: i32, %arg1: i32) -> (i32, i32) {
    %c0_i32 = arith.constant 0 : i32
    %c0_i32_0 = arith.constant 0 : i32
    %c0_i32_1 = arith.constant 0 : i32
    return %c0_i32, %c0_i32_0 : i32, i32
  }
  func.func @transform_4(%arg0: i32, %arg1: i32) -> (i32, i32) {
    %c0_i32 = arith.constant 0 : i32
    %c0_i32_0 = arith.constant 0 : i32
    %c0_i32_1 = arith.constant 0 : i32
    return %c0_i32, %c0_i32_0 : i32, i32
  }
  func.func @transform_5(%arg0: i32, %arg1: i32) -> (i32, i32) {
    %c2_i32 = arith.constant 2 : i32
    %0 = arith.muli %arg0, %c2_i32 : i32
    %1 = arith.addi %0, %arg1 : i32
    %c0_i32 = arith.constant 0 : i32
    %c0_i32_0 = arith.constant 0 : i32
    return %1, %c0_i32 : i32, i32
  }
  func.func @transform_6(%arg0: i32, %arg1: i32) -> (i32, i32) {
    %c2_i32 = arith.constant 2 : i32
    %0 = arith.muli %arg0, %c2_i32 : i32
    %1 = arith.addi %0, %arg1 : i32
    %c0_i32 = arith.constant 0 : i32
    %c0_i32_0 = arith.constant 0 : i32
    return %1, %c0_i32 : i32, i32
  }
  func.func @transform_7(%arg0: i32, %arg1: i32) -> (i32, i32, i32) {
    %c0_i32 = arith.constant 0 : i32
    %c0_i32_0 = arith.constant 0 : i32
    %c0_i32_1 = arith.constant 0 : i32
    return %arg0, %c0_i32, %c0_i32_0 : i32, i32, i32
  }
  func.func @transform_8(%arg0: i32, %arg1: i32) -> (i32, i32, i32) {
    %c0_i32 = arith.constant 0 : i32
    %c0_i32_0 = arith.constant 0 : i32
    %c0_i32_1 = arith.constant 0 : i32
    return %arg0, %c0_i32, %c0_i32_0 : i32, i32, i32
  }
}

module attributes {stable_mosaic.version = 11 : i64} {
  func.func @_stage3_kernel(%arg0: i32, %arg1: memref<96x128xf32, #tpu.memory_space<vmem>>, %arg2: memref<1x128xf32, #tpu.memory_space<vmem>>, %arg3: memref<1x128xf32, #tpu.memory_space<vmem>>, %arg4: memref<128x1152xf32, #tpu.memory_space<vmem>>, %arg5: memref<96x1152xf32, #tpu.memory_space<vmem>>) attributes {dimension_semantics = [#tpu.dimension_semantics<parallel>], iteration_bounds = array<i64: 8>, scalar_prefetch = 0 : i64, scratch_operands = 0 : i64, tpu.core_type = #tpu.core_type<tc>, window_params = [{transform_indices = @transform_0, window_bounds = array<i64: 96, 128>}, {pipeline_mode = #tpu.pipeline_mode<synchronous>, transform_indices = @transform_1, window_bounds = array<i64: 1, 128>}, {pipeline_mode = #tpu.pipeline_mode<synchronous>, transform_indices = @transform_2, window_bounds = array<i64: 1, 128>}, {pipeline_mode = #tpu.pipeline_mode<synchronous>, transform_indices = @transform_3, window_bounds = array<i64: 128, 1152>}, {transform_indices = @transform_4, window_bounds = array<i64: 96, 1152>}]} {
    %c0 = arith.constant 0 : index
    %c0_0 = arith.constant 0 : index
    %0 = vector.load %arg1[%c0, %c0_0] : memref<96x128xf32, #tpu.memory_space<vmem>>, vector<96x128xf32>
    %c0_1 = arith.constant 0 : index
    %c0_2 = arith.constant 0 : index
    %1 = vector.load %arg2[%c0_1, %c0_2] : memref<1x128xf32, #tpu.memory_space<vmem>>, vector<1x128xf32>
    %2 = vector.broadcast %1 : vector<1x128xf32> to vector<96x128xf32>
    %3 = arith.mulf %0, %2 : vector<96x128xf32>
    %c0_3 = arith.constant 0 : index
    %c0_4 = arith.constant 0 : index
    %4 = vector.load %arg3[%c0_3, %c0_4] : memref<1x128xf32, #tpu.memory_space<vmem>>, vector<1x128xf32>
    %5 = vector.broadcast %4 : vector<1x128xf32> to vector<96x128xf32>
    %6 = arith.addf %3, %5 : vector<96x128xf32>
    %cst = arith.constant 0.000000e+00 : f32
    %7 = vector.broadcast %cst : f32 to vector<96x128xf32>
    %8 = arith.maximumf %6, %7 : vector<96x128xf32>
    %c0_5 = arith.constant 0 : index
    %c0_6 = arith.constant 0 : index
    %9 = vector.load %arg4[%c0_5, %c0_6] : memref<128x1152xf32, #tpu.memory_space<vmem>>, vector<128x1152xf32>
    %cst_7 = arith.constant dense<0.000000e+00> : vector<96x1152xf32>
    %10 = tpu.matmul %8, %9, %cst_7 {dimension_numbers = #tpu.dot_dimension_numbers<[1], [0], [0], [1], [0, 0, 1, 1], [], []>} : vector<96x128xf32>, vector<128x1152xf32>, vector<96x1152xf32> -> vector<96x1152xf32>
    %c0_8 = arith.constant 0 : index
    %c0_9 = arith.constant 0 : index
    %11 = vector.load %arg5[%c0_8, %c0_9] : memref<96x1152xf32, #tpu.memory_space<vmem>>, vector<96x1152xf32>
    tpu.vector_store %arg5[%c0_8, %c0_9], %10 {strides = array<i32>} : memref<96x1152xf32, #tpu.memory_space<vmem>>, vector<96x1152xf32>,
    return
  }
  func.func @transform_0(%arg0: i32) -> (i32, i32) {
    %c0_i32 = arith.constant 0 : i32
    %c0_i32_0 = arith.constant 0 : i32
    return %arg0, %c0_i32 : i32, i32
  }
  func.func @transform_1(%arg0: i32) -> (i32, i32) {
    %c0_i32 = arith.constant 0 : i32
    %c0_i32_0 = arith.constant 0 : i32
    %c0_i32_1 = arith.constant 0 : i32
    return %c0_i32, %c0_i32_0 : i32, i32
  }
  func.func @transform_2(%arg0: i32) -> (i32, i32) {
    %c0_i32 = arith.constant 0 : i32
    %c0_i32_0 = arith.constant 0 : i32
    %c0_i32_1 = arith.constant 0 : i32
    return %c0_i32, %c0_i32_0 : i32, i32
  }
  func.func @transform_3(%arg0: i32) -> (i32, i32) {
    %c0_i32 = arith.constant 0 : i32
    %c0_i32_0 = arith.constant 0 : i32
    %c0_i32_1 = arith.constant 0 : i32
    return %c0_i32, %c0_i32_0 : i32, i32
  }
  func.func @transform_4(%arg0: i32) -> (i32, i32) {
    %c0_i32 = arith.constant 0 : i32
    %c0_i32_0 = arith.constant 0 : i32
    return %arg0, %c0_i32 : i32, i32
  }
}

</mosaic_0001>

<llo_original>
// kernel: residual_block_forward.2
$region0: #{residual_block_forward.2}
  #allocation0 [shape = 'u32[]', space=smem, size = 0x4, offset = 0x4, fixed_abs, tag = 'smem constant byte address 0x4 - core index']
  #allocation1 [shape = 'u32[144,128]{1,0:T(1,128)}', space=vmem, size = 0x12000, scoped, tag = 'internal scratch']
  %s0 = inlined_call_operand.vmem [shape: f32[768,128], index: 0, kind: input, shape index: {}]
  %s1 = inlined_call_operand.vmem [shape: f32[1,128], index: 1, kind: input, shape index: {}]
  %s2 = inlined_call_operand.vmem [shape: f32[1,128], index: 2, kind: input, shape index: {}]
  %s3 = inlined_call_operand.vmem [shape: f32[128,128], index: 3, kind: input, shape index: {}]
  %s4 = inlined_call_operand.vmem [shape: f32[128,128], index: 4, kind: input, shape index: {}]
  %s5 = inlined_call_operand.vmem [shape: f32[768,128], index: 5, kind: output, shape index: {0}]
  %s6 = inlined_call_operand.vmem [shape: f32[768,128], index: 6, kind: output, shape index: {1}]
  %s7 = inlined_call_operand.vmem [shape: f32[2,1,128], index: 7, kind: output, shape index: {2}]
  %s8 = inlined_call_operand.vmem [shape: f32[2,1,128], index: 8, kind: output, shape index: {3}]
  %9 = xla_tuple %s5, %s6, %s7, %s8
  %s10 = sld [smem:[#allocation0]]
  $region81: #{residual_block_forward.2} parent=0
    _
  %s12 = ssub.s32 1, %s10
  %s13 = scalar_select 0, %s12, %s10
  loop: start=0, step=1, limit=6
  $region2: #{residual_block_forward.2} parent=0 // loop_pre_header
    _
  $region3: #{residual_block_forward.2} parent=0 // loop_header
    %s15 = sphi 0, %s19
    %p16 = scmp.ge.s32.totalorder %s15, 6
    %s22 = sphi 0, %s34
    %s23 = sphi 0, %s30
    %s24 = sphi 0, %s22
    %s25 = sphi 0, %s23
    %s26 = sphi 0, %s24
    %s27 = sphi 0, %s25
    %s41 = sphi 0, %s43
    %s44 = sphi 0, %s41
    %s45 = sphi 0, %s44
    %s61 = sphi 0, %s45
    %s65 = sphi 0, %s65
    %s67 = sphi 0, %s65
    %s68 = sphi 0, %s67
    %s82 = sphi 0, %s68
    %s86 = sphi 0, %s86
    %s88 = sphi 0, %s86
    %s89 = sphi 0, %s88
    %s103 = sphi 0, %s89
    %s107 = sphi 0, %s107
    %s109 = sphi 0, %s107
    %s110 = sphi 0, %s109
    %s124 = sphi 0, %s110
    %s128 = sphi 0, %s128
    %s130 = sphi 0, %s128
    %s131 = sphi 0, %s130
    %s145 = sphi 0, %s131
    %s155 = sphi 0, %s157
    %s158 = sphi 0, %s155
    %s159 = sphi 0, %s158
    %s175 = sphi 0, %s159
    %s185 = sphi 0, %s187
    %s188 = sphi 0, %s185
    %s189 = sphi 0, %s188
    %s205 = sphi 0, %s189
    %s211 = sphi 0, %s213
    %s214 = sphi 0, %s211
    %s215 = sphi 0, %s214
    %s231 = sphi 0, %s215
    %s237 = sphi 0, %s239
    %s240 = sphi 0, %s237
    %s241 = sphi 0, %s240
    %s257 = sphi 0, %s241
  $region4: #{residual_block_forward.2} parent=0 // loop_header_branch
    %18 = sbr.rel (%p16) target = $region8
  $region5: #{residual_block_forward.2} parent=0 // loop_body
    %s20 = ssub.s32 %s15, 1
    %s21 = ssub.s32 %s15, 2
    %s28 = sadd.s32 1, %s23
    %p29 = scmp.ge.s32.totalorder %s28, 2
    %s30 = scalar_select %p29, 0, %s28
    %s31 = sadd.s32 1, %s22
    %s32 = scalar_select %p29, %s31, %s22
    %p33 = scmp.ge.s32.totalorder %s32, 2
    %s34 = scalar_select %p33, 0, %s32
    %s35 = smul.u32 %s22, 2
    %s36 = sadd.s32 %s35, %s23
    %s37 = smul.u32 %s34, 2
    %s38 = sadd.s32 %s37, %s30
    %s39 = ssub.s32 %s36, %s38
    %p40 = scmp.eq.s32.totalorder %s39, 0
    %s42 = sadd.s32 %s41, 1
    %s43 = scalar_select %p40, %s41, %s42
    %p46 = pneg %p40
    %p47 = scmp.eq.s32.totalorder %s15, 3
    %p48 = por %p46, %p47
    %p49 = scmp.ne.s32.totalorder %s41, %s44
    %p50 = scmp.eq.s32.totalorder %s15, 0
    %p51 = por %p49, %p50
    %p52 = scmp.ne.s32.totalorder %s41, %s44
    %p53 = scmp.eq.s32.totalorder %s20, 3
    %p54 = por %p52, %p53
    %p55 = scmp.ne.s32.totalorder %s44, %s45
    %p56 = scmp.eq.s32.totalorder %s20, 0
    %p57 = por %p55, %p56
    %p58 = scmp.ne.s32.totalorder %s44, %s45
    %p59 = scmp.eq.s32.totalorder %s21, 3
    %p60 = por %p58, %p59
    %p62 = scmp.ne.s32.totalorder %s45, %s61
    %p63 = scmp.eq.s32.totalorder %s21, 0
    %p64 = por %p62, %p63
    %s66 = sadd.s32 %s65, 1
    %p69 = scmp.eq.s32.totalorder %s15, 3
    %p70 = scmp.ne.s32.totalorder %s65, %s67
    %p71 = scmp.eq.s32.totalorder %s15, 0
    %p72 = por %p70, %p71
    %p73 = scmp.ne.s32.totalorder %s65, %s67
    %p74 = scmp.eq.s32.totalorder %s20, 3
    %p75 = por %p73, %p74
    %p76 = scmp.ne.s32.totalorder %s67, %s68
    %p77 = scmp.eq.s32.totalorder %s20, 0
    %p78 = por %p76, %p77
    %p79 = scmp.ne.s32.totalorder %s67, %s68
    %p80 = scmp.eq.s32.totalorder %s21, 3
    %p81 = por %p79, %p80
    %p83 = scmp.ne.s32.totalorder %s68, %s82
    %p84 = scmp.eq.s32.totalorder %s21, 0
    %p85 = por %p83, %p84
    %s87 = sadd.s32 %s86, 1
    %p90 = scmp.eq.s32.totalorder %s15, 3
    %p91 = scmp.ne.s32.totalorder %s86, %s88
    %p92 = scmp.eq.s32.totalorder %s15, 0
    %p93 = por %p91, %p92
    %p94 = scmp.ne.s32.totalorder %s86, %s88
    %p95 = scmp.eq.s32.totalorder %s20, 3
    %p96 = por %p94, %p95
    %p97 = scmp.ne.s32.totalorder %s88, %s89
    %p98 = scmp.eq.s32.totalorder %s20, 0
    %p99 = por %p97, %p98
    %p100 = scmp.ne.s32.totalorder %s88, %s89
    %p101 = scmp.eq.s32.totalorder %s21, 3
    %p102 = por %p100, %p101
    %p104 = scmp.ne.s32.totalorder %s89, %s103
    %p105 = scmp.eq.s32.totalorder %s21, 0
    %p106 = por %p104, %p105
    %s108 = sadd.s32 %s107, 1
    %p111 = scmp.eq.s32.totalorder %s15, 3
    %p112 = scmp.ne.s32.totalorder %s107, %s109
    %p113 = scmp.eq.s32.totalorder %s15, 0
    %p114 = por %p112, %p113
    %p115 = scmp.ne.s32.totalorder %s107, %s109
    %p116 = scmp.eq.s32.totalorder %s20, 3
    %p117 = por %p115, %p116
    %p118 = scmp.ne.s32.totalorder %s109, %s110
    %p119 = scmp.eq.s32.totalorder %s20, 0
    %p120 = por %p118, %p119
    %p121 = scmp.ne.s32.totalorder %s109, %s110
    %p122 = scmp.eq.s32.totalorder %s21, 3
    %p123 = por %p121, %p122
    %p125 = scmp.ne.s32.totalorder %s110, %s124
    %p126 = scmp.eq.s32.totalorder %s21, 0
    %p127 = por %p125, %p126
    %s129 = sadd.s32 %s128, 1
    %p132 = scmp.eq.s32.totalorder %s15, 3
    %p133 = scmp.ne.s32.totalorder %s128, %s130
    %p134 = scmp.eq.s32.totalorder %s15, 0
    %p135 = por %p133, %p134
    %p136 = scmp.ne.s32.totalorder %s128, %s130
    %p137 = scmp.eq.s32.totalorder %s20, 3
    %p138 = por %p136, %p137
    %p139 = scmp.ne.s32.totalorder %s130, %s131
    %p140 = scmp.eq.s32.totalorder %s20, 0
    %p141 = por %p139, %p140
    %p142 = scmp.ne.s32.totalorder %s130, %s131
    %p143 = scmp.eq.s32.totalorder %s21, 3
    %p144 = por %p142, %p143
    %p146 = scmp.ne.s32.totalorder %s131, %s145
    %p147 = scmp.eq.s32.totalorder %s21, 0
    %p148 = por %p146, %p147
    %s149 = smul.u32 %s22, 2
    %s150 = sadd.s32 %s149, %s23
    %s151 = smul.u32 %s34, 2
    %s152 = sadd.s32 %s151, %s30
    %s153 = ssub.s32 %s150, %s152
    %p154 = scmp.eq.s32.totalorder %s153, 0
    %s156 = sadd.s32 %s155, 1
    %s157 = scalar_select %p154, %s155, %s156
    %p160 = pneg %p154
    %p161 = scmp.eq.s32.totalorder %s15, 3
    %p162 = por %p160, %p161
    %p163 = scmp.ne.s32.totalorder %s155, %s158
    %p164 = scmp.eq.s32.totalorder %s15, 0
    %p165 = por %p163, %p164
    %p166 = scmp.ne.s32.totalorder %s155, %s158
    %p167 = scmp.eq.s32.totalorder %s20, 3
    %p168 = por %p166, %p167
    %p169 = scmp.ne.s32.totalorder %s158, %s159
    %p170 = scmp.eq.s32.totalorder %s20, 0
    %p171 = por %p169, %p170
    %p172 = scmp.ne.s32.totalorder %s158, %s159
    %p173 = scmp.eq.s32.totalorder %s21, 3
    %p174 = por %p172, %p173
    %p176 = scmp.ne.s32.totalorder %s159, %s175
    %p177 = scmp.eq.s32.totalorder %s21, 0
    %p178 = por %p176, %p177
    %s179 = smul.u32 %s22, 2
    %s180 = sadd.s32 %s179, %s23
    %s181 = smul.u32 %s34, 2
    %s182 = sadd.s32 %s181, %s30
    %s183 = ssub.s32 %s180, %s182
    %p184 = scmp.eq.s32.totalorder %s183, 0
    %s186 = sadd.s32 %s185, 1
    %s187 = scalar_select %p184, %s185, %s186
    %p190 = pneg %p184
    %p191 = scmp.eq.s32.totalorder %s15, 3
    %p192 = por %p190, %p191
    %p193 = scmp.ne.s32.totalorder %s185, %s188
    %p194 = scmp.eq.s32.totalorder %s15, 0
    %p195 = por %p193, %p194
    %p196 = scmp.ne.s32.totalorder %s185, %s188
    %p197 = scmp.eq.s32.totalorder %s20, 3
    %p198 = por %p196, %p197
    %p199 = scmp.ne.s32.totalorder %s188, %s189
    %p200 = scmp.eq.s32.totalorder %s20, 0
    %p201 = por %p199, %p200
    %p202 = scmp.ne.s32.totalorder %s188, %s189
    %p203 = scmp.eq.s32.totalorder %s21, 3
    %p204 = por %p202, %p203
    %p206 = scmp.ne.s32.totalorder %s189, %s205
    %p207 = scmp.eq.s32.totalorder %s21, 0
    %p208 = por %p206, %p207
    %s209 = ssub.s32 %s22, %s34
    %p210 = scmp.eq.s32.totalorder %s209, 0
    %s212 = sadd.s32 %s211, 1
    %s213 = scalar_select %p210, %s211, %s212
    %p216 = pneg %p210
    %p217 = scmp.eq.s32.totalorder %s15, 3
    %p218 = por %p216, %p217
    %p219 = scmp.ne.s32.totalorder %s211, %s214
    %p220 = scmp.eq.s32.totalorder %s15, 0
    %p221 = por %p219, %p220
    %p222 = scmp.ne.s32.totalorder %s211, %s214
    %p223 = scmp.eq.s32.totalorder %s20, 3
    %p224 = por %p222, %p223
    %p225 = scmp.ne.s32.totalorder %s214, %s215
    %p226 = scmp.eq.s32.totalorder %s20, 0
    %p227 = por %p225, %p226
    %p228 = scmp.ne.s32.totalorder %s214, %s215
    %p229 = scmp.eq.s32.totalorder %s21, 3
    %p230 = por %p228, %p229
    %p232 = scmp.ne.s32.totalorder %s215, %s231
    %p233 = scmp.eq.s32.totalorder %s21, 0
    %p234 = por %p232, %p233
    %s235 = ssub.s32 %s22, %s34
    %p236 = scmp.eq.s32.totalorder %s235, 0
    %s238 = sadd.s32 %s237, 1
    %s239 = scalar_select %p236, %s237, %s238
    %p242 = pneg %p236
    %p243 = scmp.eq.s32.totalorder %s15, 3
    %p244 = por %p242, %p243
    %p245 = scmp.ne.s32.totalorder %s237, %s240
    %p246 = scmp.eq.s32.totalorder %s15, 0
    %p247 = por %p245, %p246
    %p248 = scmp.ne.s32.totalorder %s237, %s240
    %p249 = scmp.eq.s32.totalorder %s20, 3
    %p250 = por %p248, %p249
    %p251 = scmp.ne.s32.totalorder %s240, %s241
    %p252 = scmp.eq.s32.totalorder %s20, 0
    %p253 = por %p251, %p252
    %p254 = scmp.ne.s32.totalorder %s240, %s241
    %p255 = scmp.eq.s32.totalorder %s21, 3
    %p256 = por %p254, %p255
    %p258 = scmp.ne.s32.totalorder %s241, %s257
    %p259 = scmp.eq.s32.totalorder %s21, 0
    %p260 = por %p258, %p259
    %p261 = scmp.le.s32.totalorder 1, %s15
    %p262 = scmp.lt.s32.totalorder %s15, 5
    %p263 = pnand %p261, %p262
    %p264 = pneg %p263
    // Predicated region
    $region9: #{residual_block_forward.2} parent=5 // pred_check
      _
    $region10: #{residual_block_forward.2} parent=5 // pred_check_branch
      %266 = sbr.rel (%p263) target = $region12
    $region11: #{residual_block_forward.2} parent=5 // pred_region
      %s267 = ssub.s32 %s15, 1
      // Predicated region
      $region13: #{residual_block_forward.2} parent=11 // pred_check
        %p268 = pneg %p78
      $region14: #{residual_block_forward.2} parent=11 // pred_check_branch
        %270 = sbr.rel (%p268) target = $region16
      $region15: #{residual_block_forward.2} parent=11 // pred_region
        _
      $region16: #{residual_block_forward.2} parent=11 // pred_fallthru
        _
      // Predicated region
      $region17: #{residual_block_forward.2} parent=11 // pred_check
        %p271 = pneg %p99
      $region18: #{residual_block_forward.2} parent=11 // pred_check_branch
        %273 = sbr.rel (%p271) target = $region20
      $region19: #{residual_block_forward.2} parent=11 // pred_region
        _
      $region20: #{residual_block_forward.2} parent=11 // pred_fallthru
        _
      // Predicated region
      $region21: #{residual_block_forward.2} parent=11 // pred_check
        %p274 = pneg %p120
      $region22: #{residual_block_forward.2} parent=11 // pred_check_branch
        %276 = sbr.rel (%p274) target = $region24
      $region23: #{residual_block_forward.2} parent=11 // pred_region
        _
      $region24: #{residual_block_forward.2} parent=11 // pred_fallthru
        _
      // Predicated region
      $region25: #{residual_block_forward.2} parent=11 // pred_check
        %p277 = pneg %p141
      $region26: #{residual_block_forward.2} parent=11 // pred_check_branch
        %279 = sbr.rel (%p277) target = $region28
      $region27: #{residual_block_forward.2} parent=11 // pred_region
        _
      $region28: #{residual_block_forward.2} parent=11 // pred_fallthru
        _
    $region12: #{residual_block_forward.2} parent=5 // pred_fallthru
      _
    %p280 = scmp.lt.s32.totalorder %s15, 4
    // Predicated region
    $region29: #{residual_block_forward.2} parent=5 // pred_check
      %p281 = pneg %p280
    $region30: #{residual_block_forward.2} parent=5 // pred_check_branch
      %283 = sbr.rel (%p281) target = $region32
    $region31: #{residual_block_forward.2} parent=5 // pred_region
      // Predicated region
      $region33: #{residual_block_forward.2} parent=31 // pred_check
        %p284 = pneg %p51
      $region34: #{residual_block_forward.2} parent=31 // pred_check_branch
        %286 = sbr.rel (%p284) target = $region36
      $region35: #{residual_block_forward.2} parent=31 // pred_region
        %s287 = smul.u32 %s22, 2
        %s288 = sadd.s32 %s287, %s23
        %s289 = smul.u32 24, %s288
        %p290 = scmp.lt.s32.totalorder %s289, 95
        %s291 = scalar_select %p290, %s289, 95
        %s292 = smul.addr %s291, 8
        %s293 = scalar_lea.vmem %s0, %s292
        %s294 = smul.u32 %s22, 2
        %s295 = sadd.s32 %s294, %s23
        %s296 = smul.u32 24, %s295
      $region36: #{residual_block_forward.2} parent=31 // pred_fallthru
        _
    $region32: #{residual_block_forward.2} parent=5 // pred_fallthru
      _
    %p297 = scmp.le.s32.totalorder 1, %s15
    %p298 = scmp.lt.s32.totalorder %s15, 5
    %p299 = pnand %p297, %p298
    %p300 = pneg %p299
    // Predicated region
    $region37: #{residual_block_forward.2} parent=5 // pred_check
      _
    $region38: #{residual_block_forward.2} parent=5 // pred_check_branch
      %302 = sbr.rel (%p299) target = $region40
    $region39: #{residual_block_forward.2} parent=5 // pred_region
      %s303 = ssub.s32 %s15, 1
      %s304 = smul.u32 %s24, 2
      %s305 = sadd.s32 %s304, %s25
      %s306 = smul.u32 24, %s305
      %p307 = scmp.lt.s32.totalorder %s306, 95
      %s308 = scalar_select %p307, %s306, 95
      %s309 = smul.addr %s308, 8
      %s310 = scalar_lea.vmem %s0, %s309
      %p311 = pneg %p57
      %p312 = pneg %p54
      %p313 = pneg %p78
      %p314 = pneg %p75
      %p315 = pneg %p99
      %p316 = pneg %p96
      %p317 = pneg %p120
      %p318 = pneg %p117
      %p319 = pneg %p141
      %p320 = pneg %p138
      %p321 = pneg %p171
      %p322 = pneg %p168
      %s323 = smul.u32 %s24, 2
      %s324 = sadd.s32 %s323, %s25
      %s325 = smul.u32 24, %s324
      %p326 = scmp.lt.s32.totalorder %s325, 95
      %s327 = scalar_select %p326, %s325, 95
      %s328 = smul.addr %s327, 8
      %s329 = scalar_lea.vmem %s5, %s328
      %p330 = pneg %p201
      %p331 = pneg %p198
      %s332 = smul.u32 %s24, 2
      %s333 = sadd.s32 %s332, %s25
      %s334 = smul.u32 24, %s333
      %p335 = scmp.lt.s32.totalorder %s334, 95
      %s336 = scalar_select %p335, %s334, 95
      %s337 = smul.addr %s336, 8
      %s338 = scalar_lea.vmem %s6, %s337
      %p339 = pneg %p227
      %p340 = pneg %p224
      %p341 = scmp.lt.s32.totalorder %s24, 1
      %s342 = scalar_select %p341, %s24, 1
      %s343 = scalar_lea.vmem %s7, %s342
      %p344 = pneg %p253
      %p345 = pneg %p250
      %p346 = scmp.lt.s32.totalorder %s24, 1
      %s347 = scalar_select %p346, %s24, 1
      %s348 = scalar_lea.vmem %s8, %s347
      %s349 = smul.u32 %s24, 2
      %s350 = sadd.s32 %s349, %s25
      %s351 = smul.u32 24, %s350
      %p352 = scmp.lt.s32.totalorder %s351, 95
      %s353 = scalar_select %p352, %s351, 95
      %s354 = smul.addr %s353, 8
      %s355 = scalar_lea.vmem %s0, %s354
      %s356 = smul.u32 %s24, 2
      %s357 = sadd.s32 %s356, %s25
      %s358 = smul.u32 24, %s357
      %s359 = smul.u32 %s24, 2
      %s360 = sadd.s32 %s359, %s25
      %s361 = smul.u32 24, %s360
      %p362 = scmp.lt.s32.totalorder %s361, 95
      %s363 = scalar_select %p362, %s361, 95
      %s364 = smul.addr %s363, 8
      %s365 = scalar_lea.vmem %s5, %s364
      %s366 = smul.u32 %s24, 2
      %s367 = sadd.s32 %s366, %s25
      %s368 = smul.u32 24, %s367
      %s369 = smul.u32 %s24, 2
      %s370 = sadd.s32 %s369, %s25
      %s371 = smul.u32 24, %s370
      %p372 = scmp.lt.s32.totalorder %s371, 95
      %s373 = scalar_select %p372, %s371, 95
      %s374 = smul.addr %s373, 8
      %s375 = scalar_lea.vmem %s6, %s374
      %s376 = smul.u32 %s24, 2
      %s377 = sadd.s32 %s376, %s25
      %s378 = smul.u32 24, %s377
      %p379 = scmp.lt.s32.totalorder %s24, 1
      %s380 = scalar_select %p379, %s24, 1
      %s381 = scalar_lea.vmem %s7, %s380
      %p382 = scmp.lt.s32.totalorder %s24, 1
      %s383 = scalar_select %p382, %s24, 1
      %s384 = scalar_lea.vmem %s8, %s383
      %p385 = scmp.eq.s32.totalorder %s25, 0
      // Predicated region
      $region41: #{residual_block_forward.2} parent=39 // pred_check
        %p386 = pneg %p385
      $region42: #{residual_block_forward.2} parent=39 // pred_check_branch
        %388 = sbr.rel (%p386) target = $region44
      $region43: #{residual_block_forward.2} parent=39 // pred_region
        %389 = vst [vmem:[%s381] sm:$0x1] 0.0
        %390 = vst [vmem:[%s384] sm:$0x1] 0.0
      $region44: #{residual_block_forward.2} parent=39 // pred_fallthru
        _
      %v391 = vld [vmem:[%s355] sm:$0xff]
      %v392 = vld [vmem:[%s355 + $0x8] sm:$0xff]
      %v393 = vld [vmem:[%s355 + $0x10] sm:$0xff]
      %v394 = vld [vmem:[%s355 + $0x18] sm:$0xff]
      %v395 = vld [vmem:[%s355 + $0x20] sm:$0xff]
      %v396 = vld [vmem:[%s355 + $0x28] sm:$0xff]
      %v397 = vld [vmem:[%s355 + $0x30] sm:$0xff]
      %v398 = vld [vmem:[%s355 + $0x38] sm:$0xff]
      %v399 = vld [vmem:[%s355 + $0x40] sm:$0xff]
      %v400 = vld [vmem:[%s355 + $0x48] sm:$0xff]
      %v401 = vld [vmem:[%s355 + $0x50] sm:$0xff]
      %v402 = vld [vmem:[%s355 + $0x58] sm:$0xff]
      %v403 = vld [vmem:[%s355 + $0x60] sm:$0xff]
      %v404 = vld [vmem:[%s355 + $0x68] sm:$0xff]
      %v405 = vld [vmem:[%s355 + $0x70] sm:$0xff]
      %v406 = vld [vmem:[%s355 + $0x78] sm:$0xff]
      %v407 = vld [vmem:[%s355 + $0x80] sm:$0xff]
      %v408 = vld [vmem:[%s355 + $0x88] sm:$0xff]
      %v409 = vld [vmem:[%s355 + $0x90] sm:$0xff]
      %v410 = vld [vmem:[%s355 + $0x98] sm:$0xff]
      %v411 = vld [vmem:[%s355 + $0xa0] sm:$0xff]
      %v412 = vld [vmem:[%s355 + $0xa8] sm:$0xff]
      %v413 = vld [vmem:[%s355 + $0xb0] sm:$0xff]
      %v414 = vld [vmem:[%s355 + $0xb8] sm:$0xff]
      %v415 = vld [vmem:[%s1] sm:$0x1]
      %v417 = vlaneseq
      %v418 = vshrl.u32 %v417, 7
      %v419 = vsub.s32 0, %v418
      %v420 = vrot.slane %v415, %v419
      %v422 = vmul.f32 %v391, %v420
      %v423 = vmul.f32 %v392, %v420
      %v424 = vmul.f32 %v393, %v420
      %v425 = vmul.f32 %v394, %v420
      %v426 = vmul.f32 %v395, %v420
      %v427 = vmul.f32 %v396, %v420
      %v428 = vmul.f32 %v397, %v420
      %v429 = vmul.f32 %v398, %v420
      %v430 = vmul.f32 %v399, %v420
      %v431 = vmul.f32 %v400, %v420
      %v432 = vmul.f32 %v401, %v420
      %v433 = vmul.f32 %v402, %v420
      %v434 = vmul.f32 %v403, %v420
      %v435 = vmul.f32 %v404, %v420
      %v436 = vmul.f32 %v405, %v420
      %v437 = vmul.f32 %v406, %v420
      %v438 = vmul.f32 %v407, %v420
      %v439 = vmul.f32 %v408, %v420
      %v440 = vmul.f32 %v409, %v420
      %v441 = vmul.f32 %v410, %v420
      %v442 = vmul.f32 %v411, %v420
      %v443 = vmul.f32 %v412, %v420
      %v444 = vmul.f32 %v413, %v420
      %v445 = vmul.f32 %v414, %v420
      %v446 = vld [vmem:[%s2] sm:$0x1]
      %v448 = vlaneseq
      %v449 = vshrl.u32 %v448, 7
      %v450 = vsub.s32 0, %v449
      %v451 = vrot.slane %v446, %v450
      %v453 = vadd.f32 %v422, %v451
      %v454 = vadd.f32 %v423, %v451
      %v455 = vadd.f32 %v424, %v451
      %v456 = vadd.f32 %v425, %v451
      %v457 = vadd.f32 %v426, %v451
      %v458 = vadd.f32 %v427, %v451
      %v459 = vadd.f32 %v428, %v451
      %v460 = vadd.f32 %v429, %v451
      %v461 = vadd.f32 %v430, %v451
      %v462 = vadd.f32 %v431, %v451
      %v463 = vadd.f32 %v432, %v451
      %v464 = vadd.f32 %v433, %v451
      %v465 = vadd.f32 %v434, %v451
      %v466 = vadd.f32 %v435, %v451
      %v467 = vadd.f32 %v436, %v451
      %v468 = vadd.f32 %v437, %v451
      %v469 = vadd.f32 %v438, %v451
      %v470 = vadd.f32 %v439, %v451
      %v471 = vadd.f32 %v440, %v451
      %v472 = vadd.f32 %v441, %v451
      %v473 = vadd.f32 %v442, %v451
      %v474 = vadd.f32 %v443, %v451
      %v475 = vadd.f32 %v444, %v451
      %v476 = vadd.f32 %v445, %v451
      %v477 = vmax.f32 %v453, 0.0
      %v478 = vmax.f32 %v454, 0.0
      %v479 = vmax.f32 %v455, 0.0
      %v480 = vmax.f32 %v456, 0.0
      %v481 = vmax.f32 %v457, 0.0
      %v482 = vmax.f32 %v458, 0.0
      %v483 = vmax.f32 %v459, 0.0
      %v484 = vmax.f32 %v460, 0.0
      %v485 = vmax.f32 %v461, 0.0
      %v486 = vmax.f32 %v462, 0.0
      %v487 = vmax.f32 %v463, 0.0
      %v488 = vmax.f32 %v464, 0.0
      %v489 = vmax.f32 %v465, 0.0
      %v490 = vmax.f32 %v466, 0.0
      %v491 = vmax.f32 %v467, 0.0
      %v492 = vmax.f32 %v468, 0.0
      %v493 = vmax.f32 %v469, 0.0
      %v494 = vmax.f32 %v470, 0.0
      %v495 = vmax.f32 %v471, 0.0
      %v496 = vmax.f32 %v472, 0.0
      %v497 = vmax.f32 %v473, 0.0
      %v498 = vmax.f32 %v474, 0.0
      %v499 = vmax.f32 %v475, 0.0
      %v500 = vmax.f32 %v476, 0.0
      %v501 = vld [vmem:[%s3] sm:$0xff]
      %v502 = vld [vmem:[%s3 + $0x8] sm:$0xff]
      %v503 = vld [vmem:[%s3 + $0x10] sm:$0xff]
      %v504 = vld [vmem:[%s3 + $0x18] sm:$0xff]
      %v505 = vld [vmem:[%s3 + $0x20] sm:$0xff]
      %v506 = vld [vmem:[%s3 + $0x28] sm:$0xff]
      %v507 = vld [vmem:[%s3 + $0x30] sm:$0xff]
      %v508 = vld [vmem:[%s3 + $0x38] sm:$0xff]
      %v509 = vld [vmem:[%s3 + $0x40] sm:$0xff]
      %v510 = vld [vmem:[%s3 + $0x48] sm:$0xff]
      %v511 = vld [vmem:[%s3 + $0x50] sm:$0xff]
      %v512 = vld [vmem:[%s3 + $0x58] sm:$0xff]
      %v513 = vld [vmem:[%s3 + $0x60] sm:$0xff]
      %v514 = vld [vmem:[%s3 + $0x68] sm:$0xff]
      %v515 = vld [vmem:[%s3 + $0x70] sm:$0xff]
      %v516 = vld [vmem:[%s3 + $0x78] sm:$0xff]
      %517 = vmatprep.subr.mxu0 0.0
      %518 = vmatpush1.msra.mxu0 %v516
      %519 = vmatprep.subr.mxu0 0.0
      %520 = vmatpush1.msra.mxu0 %v515
      %521 = vmatprep.subr.mxu0 0.0
      %522 = vmatpush1.msra.mxu0 %v514
      %523 = vmatprep.subr.mxu0 0.0
      %524 = vmatpush1.msra.mxu0 %v513
      %525 = vmatprep.subr.mxu0 0.0
      %526 = vmatpush1.msra.mxu0 %v512
      %527 = vmatprep.subr.mxu0 0.0
      %528 = vmatpush1.msra.mxu0 %v511
      %529 = vmatprep.subr.mxu0 0.0
      %530 = vmatpush1.msra.mxu0 %v510
      %531 = vmatprep.subr.mxu0 0.0
      %532 = vmatpush1.msra.mxu0 %v509
      %533 = vmatprep.subr.mxu0 0.0
      %534 = vmatpush1.msra.mxu0 %v508
      %535 = vmatprep.subr.mxu0 0.0
      %536 = vmatpush1.msra.mxu0 %v507
      %537 = vmatprep.subr.mxu0 0.0
      %538 = vmatpush1.msra.mxu0 %v506
      %539 = vmatprep.subr.mxu0 0.0
      %540 = vmatpush1.msra.mxu0 %v505
      %541 = vmatprep.subr.mxu0 0.0
      %542 = vmatpush1.msra.mxu0 %v504
      %543 = vmatprep.subr.mxu0 0.0
      %544 = vmatpush1.msra.mxu0 %v503
      %545 = vmatprep.subr.mxu0 0.0
      %546 = vmatpush1.msra.mxu0 %v502
      %547 = vmatprep.subr.mxu0 0.0
      %548 = vmatpush1.msra.mxu0 %v501
      %549 = vmatprep.subr.mxu0 0.0
      %550 = vmatpush2.msra.mxu0 0.0
      %551 = vmatprep.subr.mxu0 0.0
      %552 = vmatpush2.msra.mxu0 0.0
      %553 = vmatprep.subr.mxu0 0.0
      %554 = vmatpush2.msra.mxu0 0.0
      %555 = vmatprep.subr.mxu0 0.0
      %556 = vmatpush2.msra.mxu0 0.0
      %557 = vmatprep.subr.mxu0 0.0
      %558 = vmatpush2.msra.mxu0 0.0
      %559 = vmatprep.subr.mxu0 0.0
      %560 = vmatpush2.msra.mxu0 0.0
      %561 = vmatprep.subr.mxu0 0.0
      %562 = vmatpush2.msra.mxu0 0.0
      %563 = vmatprep.subr.mxu0 0.0
      %564 = vmatpush2.msra.mxu0 0.0
      %565 = vmatprep.subr.mxu0 0.0
      %566 = vmatpush2.msra.mxu0 0.0
      %567 = vmatprep.subr.mxu0 0.0
      %568 = vmatpush2.msra.mxu0 0.0
      %569 = vmatprep.subr.mxu0 0.0
      %570 = vmatpush2.msra.mxu0 0.0
      %571 = vmatprep.subr.mxu0 0.0
      %572 = vmatpush2.msra.mxu0 0.0
      %573 = vmatprep.subr.mxu0 0.0
      %574 = vmatpush2.msra.mxu0 0.0
      %575 = vmatprep.subr.mxu0 0.0
      %576 = vmatpush2.msra.mxu0 0.0
      %577 = vmatprep.subr.mxu0 0.0
      %578 = vmatpush2.msra.mxu0 0.0
      %579 = vmatprep.subr.mxu0 0.0
      %580 = vmatpush2.msra.mxu0 0.0
      %581 = vmatprep.mubr.f32.mxu0 0.0
      %582 = vmatmul.mubr.f32.gmra.mxu0 %v477
      %v583 = vpop.f32.mrf.mxu0
      %v584 = vadd.f32 0.0, %v583
      %v585 = vpop.f32.mrf.mxu0
      %586 = vmatprep.mubr.f32.mxu0 0.0
      %587 = vmatmul.mubr.f32.gmra.mxu0 %v478
      %v588 = vpop.f32.mrf.mxu0
      %v589 = vadd.f32 0.0, %v588
      %v590 = vpop.f32.mrf.mxu0
      %591 = vmatprep.mubr.f32.mxu0 0.0
      %592 = vmatmul.mubr.f32.gmra.mxu0 %v479
      %v593 = vpop.f32.mrf.mxu0
      %v594 = vadd.f32 0.0, %v593
      %v595 = vpop.f32.mrf.mxu0
      %596 = vmatprep.mubr.f32.mxu0 0.0
      %597 = vmatmul.mubr.f32.gmra.mxu0 %v480
      %v598 = vpop.f32.mrf.mxu0
      %v599 = vadd.f32 0.0, %v598
      %v600 = vpop.f32.mrf.mxu0
      %601 = vmatprep.mubr.f32.mxu0 0.0
      %602 = vmatmul.mubr.f32.gmra.mxu0 %v481
      %v603 = vpop.f32.mrf.mxu0
      %v604 = vadd.f32 0.0, %v603
      %v605 = vpop.f32.mrf.mxu0
      %606 = vmatprep.mubr.f32.mxu0 0.0
      %607 = vmatmul.mubr.f32.gmra.mxu0 %v482
      %v608 = vpop.f32.mrf.mxu0
      %v609 = vadd.f32 0.0, %v608
      %v610 = vpop.f32.mrf.mxu0
      %611 = vmatprep.mubr.f32.mxu0 0.0
      %612 = vmatmul.mubr.f32.gmra.mxu0 %v483
      %v613 = vpop.f32.mrf.mxu0
      %v614 = vadd.f32 0.0, %v613
      %v615 = vpop.f32.mrf.mxu0
      %616 = vmatprep.mubr.f32.mxu0 0.0
      %617 = vmatmul.mubr.f32.gmra.mxu0 %v484
      %v618 = vpop.f32.mrf.mxu0
      %v619 = vadd.f32 0.0, %v618
      %v620 = vpop.f32.mrf.mxu0
      %621 = vmatprep.mubr.f32.mxu0 0.0
      %622 = vmatmul.mubr.f32.gmra.mxu0 %v485
      %v623 = vpop.f32.mrf.mxu0
      %v624 = vadd.f32 0.0, %v623
      %v625 = vpop.f32.mrf.mxu0
      %626 = vmatprep.mubr.f32.mxu0 0.0
      %627 = vmatmul.mubr.f32.gmra.mxu0 %v486
      %v628 = vpop.f32.mrf.mxu0
      %v629 = vadd.f32 0.0, %v628
      %v630 = vpop.f32.mrf.mxu0
      %631 = vmatprep.mubr.f32.mxu0 0.0
      %632 = vmatmul.mubr.f32.gmra.mxu0 %v487
      %v633 = vpop.f32.mrf.mxu0
      %v634 = vadd.f32 0.0, %v633
      %v635 = vpop.f32.mrf.mxu0
      %636 = vmatprep.mubr.f32.mxu0 0.0
      %637 = vmatmul.mubr.f32.gmra.mxu0 %v488
      %v638 = vpop.f32.mrf.mxu0
      %v639 = vadd.f32 0.0, %v638
      %v640 = vpop.f32.mrf.mxu0
      %641 = vmatprep.mubr.f32.mxu0 0.0
      %642 = vmatmul.mubr.f32.gmra.mxu0 %v489
      %v643 = vpop.f32.mrf.mxu0
      %v644 = vadd.f32 0.0, %v643
      %v645 = vpop.f32.mrf.mxu0
      %646 = vmatprep.mubr.f32.mxu0 0.0
      %647 = vmatmul.mubr.f32.gmra.mxu0 %v490
      %v648 = vpop.f32.mrf.mxu0
      %v649 = vadd.f32 0.0, %v648
      %v650 = vpop.f32.mrf.mxu0
      %651 = vmatprep.mubr.f32.mxu0 0.0
      %652 = vmatmul.mubr.f32.gmra.mxu0 %v491
      %v653 = vpop.f32.mrf.mxu0
      %v654 = vadd.f32 0.0, %v653
      %v655 = vpop.f32.mrf.mxu0
      %656 = vmatprep.mubr.f32.mxu0 0.0
      %657 = vmatmul.mubr.f32.gmra.mxu0 %v492
      %v658 = vpop.f32.mrf.mxu0
      %v659 = vadd.f32 0.0, %v658
      %v660 = vpop.f32.mrf.mxu0
      %661 = vmatprep.mubr.f32.mxu0 0.0
      %662 = vmatmul.mubr.f32.gmra.mxu0 %v493
      %v663 = vpop.f32.mrf.mxu0
      %v664 = vadd.f32 0.0, %v663
      %v665 = vpop.f32.mrf.mxu0
      %666 = vmatprep.mubr.f32.mxu0 0.0
      %667 = vmatmul.mubr.f32.gmra.mxu0 %v494
      %v668 = vpop.f32.mrf.mxu0
      %v669 = vadd.f32 0.0, %v668
      %v670 = vpop.f32.mrf.mxu0
      %671 = vmatprep.mubr.f32.mxu0 0.0
      %672 = vmatmul.mubr.f32.gmra.mxu0 %v495
      %v673 = vpop.f32.mrf.mxu0
      %v674 = vadd.f32 0.0, %v673
      %v675 = vpop.f32.mrf.mxu0
      %676 = vmatprep.mubr.f32.mxu0 0.0
      %677 = vmatmul.mubr.f32.gmra.mxu0 %v496
      %v678 = vpop.f32.mrf.mxu0
      %v679 = vadd.f32 0.0, %v678
      %v680 = vpop.f32.mrf.mxu0
      %681 = vmatprep.mubr.f32.mxu0 0.0
      %682 = vmatmul.mubr.f32.gmra.mxu0 %v497
      %v683 = vpop.f32.mrf.mxu0
      %v684 = vadd.f32 0.0, %v683
      %v685 = vpop.f32.mrf.mxu0
      %686 = vmatprep.mubr.f32.mxu0 0.0
      %687 = vmatmul.mubr.f32.gmra.mxu0 %v498
      %v688 = vpop.f32.mrf.mxu0
      %v689 = vadd.f32 0.0, %v688
      %v690 = vpop.f32.mrf.mxu0
      %691 = vmatprep.mubr.f32.mxu0 0.0
      %692 = vmatmul.mubr.f32.gmra.mxu0 %v499
      %v693 = vpop.f32.mrf.mxu0
      %v694 = vadd.f32 0.0, %v693
      %v695 = vpop.f32.mrf.mxu0
      %696 = vmatprep.mubr.f32.mxu0 0.0
      %697 = vmatmul.mubr.f32.gmra.mxu0 %v500
      %v698 = vpop.f32.mrf.mxu0
      %v699 = vadd.f32 0.0, %v698
      %v700 = vpop.f32.mrf.mxu0
      %701 = vdwg.mxu0
      %702 = vst [vmem:[%s365] sm:$0xff] %v584
      %703 = vst [vmem:[%s365 + $0x8] sm:$0xff] %v589
      %704 = vst [vmem:[%s365 + $0x10] sm:$0xff] %v594
      %705 = vst [vmem:[%s365 + $0x18] sm:$0xff] %v599
      %706 = vst [vmem:[%s365 + $0x20] sm:$0xff] %v604
      %707 = vst [vmem:[%s365 + $0x28] sm:$0xff] %v609
      %708 = vst [vmem:[%s365 + $0x30] sm:$0xff] %v614
      %709 = vst [vmem:[%s365 + $0x38] sm:$0xff] %v619
      %710 = vst [vmem:[%s365 + $0x40] sm:$0xff] %v624
      %711 = vst [vmem:[%s365 + $0x48] sm:$0xff] %v629
      %712 = vst [vmem:[%s365 + $0x50] sm:$0xff] %v634
      %713 = vst [vmem:[%s365 + $0x58] sm:$0xff] %v639
      %714 = vst [vmem:[%s365 + $0x60] sm:$0xff] %v644
      %715 = vst [vmem:[%s365 + $0x68] sm:$0xff] %v649
      %716 = vst [vmem:[%s365 + $0x70] sm:$0xff] %v654
      %717 = vst [vmem:[%s365 + $0x78] sm:$0xff] %v659
      %718 = vst [vmem:[%s365 + $0x80] sm:$0xff] %v664
      %719 = vst [vmem:[%s365 + $0x88] sm:$0xff] %v669
      %720 = vst [vmem:[%s365 + $0x90] sm:$0xff] %v674
      %721 = vst [vmem:[%s365 + $0x98] sm:$0xff] %v679
      %722 = vst [vmem:[%s365 + $0xa0] sm:$0xff] %v684
      %723 = vst [vmem:[%s365 + $0xa8] sm:$0xff] %v689
      %724 = vst [vmem:[%s365 + $0xb0] sm:$0xff] %v694
      %725 = vst [vmem:[%s365 + $0xb8] sm:$0xff] %v699
      %v726 = vld [vmem:[%s4] sm:$0xff]
      %v727 = vld [vmem:[%s4 + $0x8] sm:$0xff]
      %v728 = vld [vmem:[%s4 + $0x10] sm:$0xff]
      %v729 = vld [vmem:[%s4 + $0x18] sm:$0xff]
      %v730 = vld [vmem:[%s4 + $0x20] sm:$0xff]
      %v731 = vld [vmem:[%s4 + $0x28] sm:$0xff]
      %v732 = vld [vmem:[%s4 + $0x30] sm:$0xff]
      %v733 = vld [vmem:[%s4 + $0x38] sm:$0xff]
      %v734 = vld [vmem:[%s4 + $0x40] sm:$0xff]
      %v735 = vld [vmem:[%s4 + $0x48] sm:$0xff]
      %v736 = vld [vmem:[%s4 + $0x50] sm:$0xff]
      %v737 = vld [vmem:[%s4 + $0x58] sm:$0xff]
      %v738 = vld [vmem:[%s4 + $0x60] sm:$0xff]
      %v739 = vld [vmem:[%s4 + $0x68] sm:$0xff]
      %v740 = vld [vmem:[%s4 + $0x70] sm:$0xff]
      %v741 = vld [vmem:[%s4 + $0x78] sm:$0xff]
      %742 = vmatprep.subr.mxu0 0.0
      %743 = vmatpush1.msra.mxu0 %v741
      %744 = vmatprep.subr.mxu0 0.0
      %745 = vmatpush1.msra.mxu0 %v740
      %746 = vmatprep.subr.mxu0 0.0
      %747 = vmatpush1.msra.mxu0 %v739
      %748 = vmatprep.subr.mxu0 0.0
      %749 = vmatpush1.msra.mxu0 %v738
      %750 = vmatprep.subr.mxu0 0.0
      %751 = vmatpush1.msra.mxu0 %v737
      %752 = vmatprep.subr.mxu0 0.0
      %753 = vmatpush1.msra.mxu0 %v736
      %754 = vmatprep.subr.mxu0 0.0
      %755 = vmatpush1.msra.mxu0 %v735
      %756 = vmatprep.subr.mxu0 0.0
      %757 = vmatpush1.msra.mxu0 %v734
      %758 = vmatprep.subr.mxu0 0.0
      %759 = vmatpush1.msra.mxu0 %v733
      %760 = vmatprep.subr.mxu0 0.0
      %761 = vmatpush1.msra.mxu0 %v732
      %762 = vmatprep.subr.mxu0 0.0
      %763 = vmatpush1.msra.mxu0 %v731
      %764 = vmatprep.subr.mxu0 0.0
      %765 = vmatpush1.msra.mxu0 %v730
      %766 = vmatprep.subr.mxu0 0.0
      %767 = vmatpush1.msra.mxu0 %v729
      %768 = vmatprep.subr.mxu0 0.0
      %769 = vmatpush1.msra.mxu0 %v728
      %770 = vmatprep.subr.mxu0 0.0
      %771 = vmatpush1.msra.mxu0 %v727
      %772 = vmatprep.subr.mxu0 0.0
      %773 = vmatpush1.msra.mxu0 %v726
      %774 = vmatprep.subr.mxu0 0.0
      %775 = vmatpush2.msra.mxu0 0.0
      %776 = vmatprep.subr.mxu0 0.0
      %777 = vmatpush2.msra.mxu0 0.0
      %778 = vmatprep.subr.mxu0 0.0
      %779 = vmatpush2.msra.mxu0 0.0
      %780 = vmatprep.subr.mxu0 0.0
      %781 = vmatpush2.msra.mxu0 0.0
      %782 = vmatprep.subr.mxu0 0.0
      %783 = vmatpush2.msra.mxu0 0.0
      %784 = vmatprep.subr.mxu0 0.0
      %785 = vmatpush2.msra.mxu0 0.0
      %786 = vmatprep.subr.mxu0 0.0
      %787 = vmatpush2.msra.mxu0 0.0
      %788 = vmatprep.subr.mxu0 0.0
      %789 = vmatpush2.msra.mxu0 0.0
      %790 = vmatprep.subr.mxu0 0.0
      %791 = vmatpush2.msra.mxu0 0.0
      %792 = vmatprep.subr.mxu0 0.0
      %793 = vmatpush2.msra.mxu0 0.0
      %794 = vmatprep.subr.mxu0 0.0
      %795 = vmatpush2.msra.mxu0 0.0
      %796 = vmatprep.subr.mxu0 0.0
      %797 = vmatpush2.msra.mxu0 0.0
      %798 = vmatprep.subr.mxu0 0.0
      %799 = vmatpush2.msra.mxu0 0.0
      %800 = vmatprep.subr.mxu0 0.0
      %801 = vmatpush2.msra.mxu0 0.0
      %802 = vmatprep.subr.mxu0 0.0
      %803 = vmatpush2.msra.mxu0 0.0
      %804 = vmatprep.subr.mxu0 0.0
      %805 = vmatpush2.msra.mxu0 0.0
      %806 = vmatprep.mubr.f32.mxu0 0.0
      %807 = vmatmul.mubr.f32.gmra.mxu0 %v391
      %v808 = vpop.f32.mrf.mxu0
      %v809 = vadd.f32 0.0, %v808
      %v810 = vpop.f32.mrf.mxu0
      %811 = vmatprep.mubr.f32.mxu0 0.0
      %812 = vmatmul.mubr.f32.gmra.mxu0 %v392
      %v813 = vpop.f32.mrf.mxu0
      %v814 = vadd.f32 0.0, %v813
      %v815 = vpop.f32.mrf.mxu0
      %816 = vmatprep.mubr.f32.mxu0 0.0
      %817 = vmatmul.mubr.f32.gmra.mxu0 %v393
      %v818 = vpop.f32.mrf.mxu0
      %v819 = vadd.f32 0.0, %v818
      %v820 = vpop.f32.mrf.mxu0
      %821 = vmatprep.mubr.f32.mxu0 0.0
      %822 = vmatmul.mubr.f32.gmra.mxu0 %v394
      %v823 = vpop.f32.mrf.mxu0
      %v824 = vadd.f32 0.0, %v823
      %v825 = vpop.f32.mrf.mxu0
      %826 = vmatprep.mubr.f32.mxu0 0.0
      %827 = vmatmul.mubr.f32.gmra.mxu0 %v395
      %v828 = vpop.f32.mrf.mxu0
      %v829 = vadd.f32 0.0, %v828
      %v830 = vpop.f32.mrf.mxu0
      %831 = vmatprep.mubr.f32.mxu0 0.0
      %832 = vmatmul.mubr.f32.gmra.mxu0 %v396
      %v833 = vpop.f32.mrf.mxu0
      %v834 = vadd.f32 0.0, %v833
      %v835 = vpop.f32.mrf.mxu0
      %836 = vmatprep.mubr.f32.mxu0 0.0
      %837 = vmatmul.mubr.f32.gmra.mxu0 %v397
      %v838 = vpop.f32.mrf.mxu0
      %v839 = vadd.f32 0.0, %v838
      %v840 = vpop.f32.mrf.mxu0
      %841 = vmatprep.mubr.f32.mxu0 0.0
      %842 = vmatmul.mubr.f32.gmra.mxu0 %v398
      %v843 = vpop.f32.mrf.mxu0
      %v844 = vadd.f32 0.0, %v843
      %v845 = vpop.f32.mrf.mxu0
      %846 = vmatprep.mubr.f32.mxu0 0.0
      %847 = vmatmul.mubr.f32.gmra.mxu0 %v399
      %v848 = vpop.f32.mrf.mxu0
      %v849 = vadd.f32 0.0, %v848
      %v850 = vpop.f32.mrf.mxu0
      %851 = vmatprep.mubr.f32.mxu0 0.0
      %852 = vmatmul.mubr.f32.gmra.mxu0 %v400
      %v853 = vpop.f32.mrf.mxu0
      %v854 = vadd.f32 0.0, %v853
      %v855 = vpop.f32.mrf.mxu0
      %856 = vmatprep.mubr.f32.mxu0 0.0
      %857 = vmatmul.mubr.f32.gmra.mxu0 %v401
      %v858 = vpop.f32.mrf.mxu0
      %v859 = vadd.f32 0.0, %v858
      %v860 = vpop.f32.mrf.mxu0
      %861 = vmatprep.mubr.f32.mxu0 0.0
      %862 = vmatmul.mubr.f32.gmra.mxu0 %v402
      %v863 = vpop.f32.mrf.mxu0
      %v864 = vadd.f32 0.0, %v863
      %v865 = vpop.f32.mrf.mxu0
      %866 = vmatprep.mubr.f32.mxu0 0.0
      %867 = vmatmul.mubr.f32.gmra.mxu0 %v403
      %v868 = vpop.f32.mrf.mxu0
      %v869 = vadd.f32 0.0, %v868
      %v870 = vpop.f32.mrf.mxu0
      %871 = vmatprep.mubr.f32.mxu0 0.0
      %872 = vmatmul.mubr.f32.gmra.mxu0 %v404
      %v873 = vpop.f32.mrf.mxu0
      %v874 = vadd.f32 0.0, %v873
      %v875 = vpop.f32.mrf.mxu0
      %876 = vmatprep.mubr.f32.mxu0 0.0
      %877 = vmatmul.mubr.f32.gmra.mxu0 %v405
      %v878 = vpop.f32.mrf.mxu0
      %v879 = vadd.f32 0.0, %v878
      %v880 = vpop.f32.mrf.mxu0
      %881 = vmatprep.mubr.f32.mxu0 0.0
      %882 = vmatmul.mubr.f32.gmra.mxu0 %v406
      %v883 = vpop.f32.mrf.mxu0
      %v884 = vadd.f32 0.0, %v883
      %v885 = vpop.f32.mrf.mxu0
      %886 = vmatprep.mubr.f32.mxu0 0.0
      %887 = vmatmul.mubr.f32.gmra.mxu0 %v407
      %v888 = vpop.f32.mrf.mxu0
      %v889 = vadd.f32 0.0, %v888
      %v890 = vpop.f32.mrf.mxu0
      %891 = vmatprep.mubr.f32.mxu0 0.0
      %892 = vmatmul.mubr.f32.gmra.mxu0 %v408
      %v893 = vpop.f32.mrf.mxu0
      %v894 = vadd.f32 0.0, %v893
      %v895 = vpop.f32.mrf.mxu0
      %896 = vmatprep.mubr.f32.mxu0 0.0
      %897 = vmatmul.mubr.f32.gmra.mxu0 %v409
      %v898 = vpop.f32.mrf.mxu0
      %v899 = vadd.f32 0.0, %v898
      %v900 = vpop.f32.mrf.mxu0
      %901 = vmatprep.mubr.f32.mxu0 0.0
      %902 = vmatmul.mubr.f32.gmra.mxu0 %v410
      %v903 = vpop.f32.mrf.mxu0
      %v904 = vadd.f32 0.0, %v903
      %v905 = vpop.f32.mrf.mxu0
      %906 = vmatprep.mubr.f32.mxu0 0.0
      %907 = vmatmul.mubr.f32.gmra.mxu0 %v411
      %v908 = vpop.f32.mrf.mxu0
      %v909 = vadd.f32 0.0, %v908
      %v910 = vpop.f32.mrf.mxu0
      %911 = vmatprep.mubr.f32.mxu0 0.0
      %912 = vmatmul.mubr.f32.gmra.mxu0 %v412
      %v913 = vpop.f32.mrf.mxu0
      %v914 = vadd.f32 0.0, %v913
      %v915 = vpop.f32.mrf.mxu0
      %916 = vmatprep.mubr.f32.mxu0 0.0
      %917 = vmatmul.mubr.f32.gmra.mxu0 %v413
      %v918 = vpop.f32.mrf.mxu0
      %v919 = vadd.f32 0.0, %v918
      %v920 = vpop.f32.mrf.mxu0
      %921 = vmatprep.mubr.f32.mxu0 0.0
      %922 = vmatmul.mubr.f32.gmra.mxu0 %v414
      %v923 = vpop.f32.mrf.mxu0
      %v924 = vadd.f32 0.0, %v923
      %v925 = vpop.f32.mrf.mxu0
      %926 = vdwg.mxu0
      %927 = vst [vmem:[%s375] sm:$0xff] %v809
      %928 = vst [vmem:[%s375 + $0x8] sm:$0xff] %v814
      %929 = vst [vmem:[%s375 + $0x10] sm:$0xff] %v819
      %930 = vst [vmem:[%s375 + $0x18] sm:$0xff] %v824
      %931 = vst [vmem:[%s375 + $0x20] sm:$0xff] %v829
      %932 = vst [vmem:[%s375 + $0x28] sm:$0xff] %v834
      %933 = vst [vmem:[%s375 + $0x30] sm:$0xff] %v839
      %934 = vst [vmem:[%s375 + $0x38] sm:$0xff] %v844
      %935 = vst [vmem:[%s375 + $0x40] sm:$0xff] %v849
      %936 = vst [vmem:[%s375 + $0x48] sm:$0xff] %v854
      %937 = vst [vmem:[%s375 + $0x50] sm:$0xff] %v859
      %938 = vst [vmem:[%s375 + $0x58] sm:$0xff] %v864
      %939 = vst [vmem:[%s375 + $0x60] sm:$0xff] %v869
      %940 = vst [vmem:[%s375 + $0x68] sm:$0xff] %v874
      %941 = vst [vmem:[%s375 + $0x70] sm:$0xff] %v879
      %942 = vst [vmem:[%s375 + $0x78] sm:$0xff] %v884
      %943 = vst [vmem:[%s375 + $0x80] sm:$0xff] %v889
      %944 = vst [vmem:[%s375 + $0x88] sm:$0xff] %v894
      %945 = vst [vmem:[%s375 + $0x90] sm:$0xff] %v899
      %946 = vst [vmem:[%s375 + $0x98] sm:$0xff] %v904
      %947 = vst [vmem:[%s375 + $0xa0] sm:$0xff] %v909
      %948 = vst [vmem:[%s375 + $0xa8] sm:$0xff] %v914
      %949 = vst [vmem:[%s375 + $0xb0] sm:$0xff] %v919
      %950 = vst [vmem:[%s375 + $0xb8] sm:$0xff] %v924
      %v951 = vld [vmem:[%s381] sm:$0x1]
      %v952 = vadd.f32 %v584, %v589
      %v953 = vadd.f32 %v952, %v594
      %v954 = vadd.f32 %v953, %v599
      %v955 = vadd.f32 %v954, %v604
      %v956 = vadd.f32 %v955, %v609
      %v957 = vadd.f32 %v956, %v614
      %v958 = vadd.f32 %v957, %v619
      %v959 = vadd.f32 %v958, %v624
      %v960 = vadd.f32 %v959, %v629
      %v961 = vadd.f32 %v960, %v634
      %v962 = vadd.f32 %v961, %v639
      %v963 = vadd.f32 %v962, %v644
      %v964 = vadd.f32 %v963, %v649
      %v965 = vadd.f32 %v964, %v654
      %v966 = vadd.f32 %v965, %v659
      %v967 = vadd.f32 %v966, %v664
      %v968 = vadd.f32 %v967, %v669
      %v969 = vadd.f32 %v968, %v674
      %v970 = vadd.f32 %v969, %v679
      %v971 = vadd.f32 %v970, %v684
      %v972 = vadd.f32 %v971, %v689
      %v973 = vadd.f32 %v972, %v694
      %v974 = vadd.f32 %v973, %v699
      %v975 = vrot.slane %v974, 4
      %v976 = vadd.f32 %v974, %v975
      %v977 = vrot.slane %v976, 2
      %v978 = vadd.f32 %v976, %v977
      %v979 = vrot.slane %v978, 1
      %v980 = vadd.f32 %v978, %v979
      %v981 = vadd.f32 %v951, %v980
      %982 = vst [vmem:[%s381] sm:$0x1] %v981
      %v983 = vld [vmem:[%s384] sm:$0x1]
      %v984 = vmul.f32 %v584, %v584
      %v985 = vmul.f32 %v589, %v589
      %v986 = vmul.f32 %v594, %v594
      %v987 = vmul.f32 %v599, %v599
      %v988 = vmul.f32 %v604, %v604
      %v989 = vmul.f32 %v609, %v609
      %v990 = vmul.f32 %v614, %v614
      %v991 = vmul.f32 %v619, %v619
      %v992 = vmul.f32 %v624, %v624
      %v993 = vmul.f32 %v629, %v629
      %v994 = vmul.f32 %v634, %v634
      %v995 = vmul.f32 %v639, %v639
      %v996 = vmul.f32 %v644, %v644
      %v997 = vmul.f32 %v649, %v649
      %v998 = vmul.f32 %v654, %v654
      %v999 = vmul.f32 %v659, %v659
      %v1000 = vmul.f32 %v664, %v664
      %v1001 = vmul.f32 %v669, %v669
      %v1002 = vmul.f32 %v674, %v674
      %v1003 = vmul.f32 %v679, %v679
      %v1004 = vmul.f32 %v684, %v684
      %v1005 = vmul.f32 %v689, %v689
      %v1006 = vmul.f32 %v694, %v694
      %v1007 = vmul.f32 %v699, %v699
      %v1008 = vadd.f32 %v984, %v985
      %v1009 = vadd.f32 %v1008, %v986
      %v1010 = vadd.f32 %v1009, %v987
      %v1011 = vadd.f32 %v1010, %v988
      %v1012 = vadd.f32 %v1011, %v989
      %v1013 = vadd.f32 %v1012, %v990
      %v1014 = vadd.f32 %v1013, %v991
      %v1015 = vadd.f32 %v1014, %v992
      %v1016 = vadd.f32 %v1015, %v993
      %v1017 = vadd.f32 %v1016, %v994
      %v1018 = vadd.f32 %v1017, %v995
      %v1019 = vadd.f32 %v1018, %v996
      %v1020 = vadd.f32 %v1019, %v997
      %v1021 = vadd.f32 %v1020, %v998
      %v1022 = vadd.f32 %v1021, %v999
      %v1023 = vadd.f32 %v1022, %v1000
      %v1024 = vadd.f32 %v1023, %v1001
      %v1025 = vadd.f32 %v1024, %v1002
      %v1026 = vadd.f32 %v1025, %v1003
      %v1027 = vadd.f32 %v1026, %v1004
      %v1028 = vadd.f32 %v1027, %v1005
      %v1029 = vadd.f32 %v1028, %v1006
      %v1030 = vadd.f32 %v1029, %v1007
      %v1031 = vrot.slane %v1030, 4
      %v1032 = vadd.f32 %v1030, %v1031
      %v1033 = vrot.slane %v1032, 2
      %v1034 = vadd.f32 %v1032, %v1033
      %v1035 = vrot.slane %v1034, 1
      %v1036 = vadd.f32 %v1034, %v1035
      %v1037 = vadd.f32 %v983, %v1036
      %1038 = vst [vmem:[%s384] sm:$0x1] %v1037
      %s1039 = smul.u32 %s24, 2
      %s1040 = sadd.s32 %s1039, %s25
      %s1041 = smul.u32 24, %s1040
      %p1042 = scmp.lt.s32.totalorder %s1041, 95
      %s1043 = scalar_select %p1042, %s1041, 95
      %s1044 = smul.addr %s1043, 8
      %s1045 = scalar_lea.vmem %s5, %s1044
      %s1046 = smul.u32 %s24, 2
      %s1047 = sadd.s32 %s1046, %s25
      %s1048 = smul.u32 24, %s1047
      %p1049 = scmp.lt.s32.totalorder %s1048, 95
      %s1050 = scalar_select %p1049, %s1048, 95
      %s1051 = smul.addr %s1050, 8
      %s1052 = scalar_lea.vmem %s6, %s1051
      %p1053 = scmp.lt.s32.totalorder %s24, 1
      %s1054 = scalar_select %p1053, %s24, 1
      %s1055 = scalar_lea.vmem %s7, %s1054
      %p1056 = scmp.lt.s32.totalorder %s24, 1
      %s1057 = scalar_select %p1056, %s24, 1
      %s1058 = scalar_lea.vmem %s8, %s1057
      // Predicated region
      $region45: #{residual_block_forward.2} parent=39 // pred_check
        %p1059 = pneg %p168
      $region46: #{residual_block_forward.2} parent=39 // pred_check_branch
        %1061 = sbr.rel (%p1059) target = $region48
      $region47: #{residual_block_forward.2} parent=39 // pred_region
        %s1062 = smul.u32 %s24, 2
        %s1063 = sadd.s32 %s1062, %s25
        %s1064 = smul.u32 24, %s1063
      $region48: #{residual_block_forward.2} parent=39 // pred_fallthru
        _
      // Predicated region
      $region49: #{residual_block_forward.2} parent=39 // pred_check
        %p1065 = pneg %p198
      $region50: #{residual_block_forward.2} parent=39 // pred_check_branch
        %1067 = sbr.rel (%p1065) target = $region52
      $region51: #{residual_block_forward.2} parent=39 // pred_region
        %s1068 = smul.u32 %s24, 2
        %s1069 = sadd.s32 %s1068, %s25
        %s1070 = smul.u32 24, %s1069
      $region52: #{residual_block_forward.2} parent=39 // pred_fallthru
        _
      // Predicated region
      $region53: #{residual_block_forward.2} parent=39 // pred_check
        %p1071 = pneg %p224
      $region54: #{residual_block_forward.2} parent=39 // pred_check_branch
        %1073 = sbr.rel (%p1071) target = $region56
      $region55: #{residual_block_forward.2} parent=39 // pred_region
        _
      $region56: #{residual_block_forward.2} parent=39 // pred_fallthru
        _
      // Predicated region
      $region57: #{residual_block_forward.2} parent=39 // pred_check
        %p1074 = pneg %p250
      $region58: #{residual_block_forward.2} parent=39 // pred_check_branch
        %1076 = sbr.rel (%p1074) target = $region60
      $region59: #{residual_block_forward.2} parent=39 // pred_region
        _
      $region60: #{residual_block_forward.2} parent=39 // pred_fallthru
        _
    $region40: #{residual_block_forward.2} parent=5 // pred_fallthru
      _
    %p1077 = scmp.le.s32.totalorder 2, %s15
    // Predicated region
    $region61: #{residual_block_forward.2} parent=5 // pred_check
      %p1078 = pneg %p1077
    $region62: #{residual_block_forward.2} parent=5 // pred_check_branch
      %1080 = sbr.rel (%p1078) target = $region64
    $region63: #{residual_block_forward.2} parent=5 // pred_region
      %s1081 = ssub.s32 %s15, 2
      // Predicated region
      $region65: #{residual_block_forward.2} parent=63 // pred_check
        %p1082 = pneg %p174
      $region66: #{residual_block_forward.2} parent=63 // pred_check_branch
        %1084 = sbr.rel (%p1082) target = $region68
      $region67: #{residual_block_forward.2} parent=63 // pred_region
        %s1085 = smul.u32 %s26, 2
        %s1086 = sadd.s32 %s1085, %s27
        %s1087 = smul.u32 24, %s1086
        %p1088 = scmp.lt.s32.totalorder %s1087, 95
        %s1089 = scalar_select %p1088, %s1087, 95
        %s1090 = smul.addr %s1089, 8
        %s1091 = scalar_lea.vmem %s5, %s1090
      $region68: #{residual_block_forward.2} parent=63 // pred_fallthru
        _
      // Predicated region
      $region69: #{residual_block_forward.2} parent=63 // pred_check
        %p1092 = pneg %p204
      $region70: #{residual_block_forward.2} parent=63 // pred_check_branch
        %1094 = sbr.rel (%p1092) target = $region72
      $region71: #{residual_block_forward.2} parent=63 // pred_region
        %s1095 = smul.u32 %s26, 2
        %s1096 = sadd.s32 %s1095, %s27
        %s1097 = smul.u32 24, %s1096
        %p1098 = scmp.lt.s32.totalorder %s1097, 95
        %s1099 = scalar_select %p1098, %s1097, 95
        %s1100 = smul.addr %s1099, 8
        %s1101 = scalar_lea.vmem %s6, %s1100
      $region72: #{residual_block_forward.2} parent=63 // pred_fallthru
        _
      // Predicated region
      $region73: #{residual_block_forward.2} parent=63 // pred_check
        %p1102 = pneg %p230
      $region74: #{residual_block_forward.2} parent=63 // pred_check_branch
        %1104 = sbr.rel (%p1102) target = $region76
      $region75: #{residual_block_forward.2} parent=63 // pred_region
        %p1105 = scmp.lt.s32.totalorder %s26, 1
        %s1106 = scalar_select %p1105, %s26, 1
        %s1107 = scalar_lea.vmem %s7, %s1106
      $region76: #{residual_block_forward.2} parent=63 // pred_fallthru
        _
      // Predicated region
      $region77: #{residual_block_forward.2} parent=63 // pred_check
        %p1108 = pneg %p256
      $region78: #{residual_block_forward.2} parent=63 // pred_check_branch
        %1110 = sbr.rel (%p1108) target = $region80
      $region79: #{residual_block_forward.2} parent=63 // pred_region
        %p1111 = scmp.lt.s32.totalorder %s26, 1
        %s1112 = scalar_select %p1111, %s26, 1
        %s1113 = scalar_lea.vmem %s8, %s1112
      $region80: #{residual_block_forward.2} parent=63 // pred_fallthru
        _
    $region64: #{residual_block_forward.2} parent=5 // pred_fallthru
      _
  $region6: #{residual_block_forward.2} parent=0 // loop_footer
    %s19 = sadd.s32 1, %s15
  $region7: #{residual_block_forward.2} parent=0 // loop_footer_branch
    %14 = sbr.rel target = $region3
  $region8: #{residual_block_forward.2} parent=0 // loop_exit
    _

// kernel: residual_block_forward.3
$region0: #{residual_block_forward.3}
  #allocation0 [shape = 'u32[]', space=smem, size = 0x4, offset = 0x4, fixed_abs, tag = 'smem constant byte address 0x4 - core index']
  #allocation1 [shape = 'u32[144,128]{1,0:T(1,128)}', space=vmem, size = 0x12000, scoped, tag = 'internal scratch']
  %s0 = inlined_call_operand.vmem [shape: f32[768,128], index: 0, kind: input, shape index: {}]
  %s1 = inlined_call_operand.vmem [shape: f32[1,128], index: 1, kind: input, shape index: {}]
  %s2 = inlined_call_operand.vmem [shape: f32[1,128], index: 2, kind: input, shape index: {}]
  %s3 = inlined_call_operand.vmem [shape: f32[128,1152], index: 3, kind: input, shape index: {}]
  %s4 = inlined_call_operand.vmem [shape: f32[768,1152], index: 4, kind: output, shape index: {}]
  %s5 = sld [smem:[#allocation0]]
  $region49: #{residual_block_forward.3} parent=0
    _
  %s7 = ssub.s32 1, %s5
  %s8 = scalar_select 0, %s7, %s5
  loop: start=0, step=1, limit=10
  $region2: #{residual_block_forward.3} parent=0 // loop_pre_header
    _
  $region3: #{residual_block_forward.3} parent=0 // loop_header
    %s10 = sphi 0, %s14
    %p11 = scmp.ge.s32.totalorder %s10, 10
    %s20 = sphi 0, %s22
    %s23 = sphi 0, %s20
    %s24 = sphi 0, %s23
    %s40 = sphi 0, %s24
    %s44 = sphi 0, %s44
    %s46 = sphi 0, %s44
    %s47 = sphi 0, %s46
    %s61 = sphi 0, %s47
    %s65 = sphi 0, %s65
    %s67 = sphi 0, %s65
    %s68 = sphi 0, %s67
    %s82 = sphi 0, %s68
    %s86 = sphi 0, %s86
    %s88 = sphi 0, %s86
    %s89 = sphi 0, %s88
    %s103 = sphi 0, %s89
    %s109 = sphi 0, %s111
    %s112 = sphi 0, %s109
    %s113 = sphi 0, %s112
    %s129 = sphi 0, %s113
  $region4: #{residual_block_forward.3} parent=0 // loop_header_branch
    %13 = sbr.rel (%p11) target = $region8
  $region5: #{residual_block_forward.3} parent=0 // loop_body
    %s15 = ssub.s32 %s10, 1
    %s16 = ssub.s32 %s10, 2
    %s17 = sadd.s32 %s10, 1
    %s18 = ssub.s32 %s10, %s17
    %p19 = scmp.eq.s32.totalorder %s18, 0
    %s21 = sadd.s32 %s20, 1
    %s22 = scalar_select %p19, %s20, %s21
    %p25 = pneg %p19
    %p26 = scmp.eq.s32.totalorder %s10, 7
    %p27 = por %p25, %p26
    %p28 = scmp.ne.s32.totalorder %s20, %s23
    %p29 = scmp.eq.s32.totalorder %s10, 0
    %p30 = por %p28, %p29
    %p31 = scmp.ne.s32.totalorder %s20, %s23
    %p32 = scmp.eq.s32.totalorder %s15, 7
    %p33 = por %p31, %p32
    %p34 = scmp.ne.s32.totalorder %s23, %s24
    %p35 = scmp.eq.s32.totalorder %s15, 0
    %p36 = por %p34, %p35
    %p37 = scmp.ne.s32.totalorder %s23, %s24
    %p38 = scmp.eq.s32.totalorder %s16, 7
    %p39 = por %p37, %p38
    %p41 = scmp.ne.s32.totalorder %s24, %s40
    %p42 = scmp.eq.s32.totalorder %s16, 0
    %p43 = por %p41, %p42
    %s45 = sadd.s32 %s44, 1
    %p48 = scmp.eq.s32.totalorder %s10, 7
    %p49 = scmp.ne.s32.totalorder %s44, %s46
    %p50 = scmp.eq.s32.totalorder %s10, 0
    %p51 = por %p49, %p50
    %p52 = scmp.ne.s32.totalorder %s44, %s46
    %p53 = scmp.eq.s32.totalorder %s15, 7
    %p54 = por %p52, %p53
    %p55 = scmp.ne.s32.totalorder %s46, %s47
    %p56 = scmp.eq.s32.totalorder %s15, 0
    %p57 = por %p55, %p56
    %p58 = scmp.ne.s32.totalorder %s46, %s47
    %p59 = scmp.eq.s32.totalorder %s16, 7
    %p60 = por %p58, %p59
    %p62 = scmp.ne.s32.totalorder %s47, %s61
    %p63 = scmp.eq.s32.totalorder %s16, 0
    %p64 = por %p62, %p63
    %s66 = sadd.s32 %s65, 1
    %p69 = scmp.eq.s32.totalorder %s10, 7
    %p70 = scmp.ne.s32.totalorder %s65, %s67
    %p71 = scmp.eq.s32.totalorder %s10, 0
    %p72 = por %p70, %p71
    %p73 = scmp.ne.s32.totalorder %s65, %s67
    %p74 = scmp.eq.s32.totalorder %s15, 7
    %p75 = por %p73, %p74
    %p76 = scmp.ne.s32.totalorder %s67, %s68
    %p77 = scmp.eq.s32.totalorder %s15, 0
    %p78 = por %p76, %p77
    %p79 = scmp.ne.s32.totalorder %s67, %s68
    %p80 = scmp.eq.s32.totalorder %s16, 7
    %p81 = por %p79, %p80
    %p83 = scmp.ne.s32.totalorder %s68, %s82
    %p84 = scmp.eq.s32.totalorder %s16, 0
    %p85 = por %p83, %p84
    %s87 = sadd.s32 %s86, 1
    %p90 = scmp.eq.s32.totalorder %s10, 7
    %p91 = scmp.ne.s32.totalorder %s86, %s88
    %p92 = scmp.eq.s32.totalorder %s10, 0
    %p93 = por %p91, %p92
    %p94 = scmp.ne.s32.totalorder %s86, %s88
    %p95 = scmp.eq.s32.totalorder %s15, 7
    %p96 = por %p94, %p95
    %p97 = scmp.ne.s32.totalorder %s88, %s89
    %p98 = scmp.eq.s32.totalorder %s15, 0
    %p99 = por %p97, %p98
    %p100 = scmp.ne.s32.totalorder %s88, %s89
    %p101 = scmp.eq.s32.totalorder %s16, 7
    %p102 = por %p100, %p101
    %p104 = scmp.ne.s32.totalorder %s89, %s103
    %p105 = scmp.eq.s32.totalorder %s16, 0
    %p106 = por %p104, %p105
    %s107 = ssub.s32 %s10, %s17
    %p108 = scmp.eq.s32.totalorder %s107, 0
    %s110 = sadd.s32 %s109, 1
    %s111 = scalar_select %p108, %s109, %s110
    %p114 = pneg %p108
    %p115 = scmp.eq.s32.totalorder %s10, 7
    %p116 = por %p114, %p115
    %p117 = scmp.ne.s32.totalorder %s109, %s112
    %p118 = scmp.eq.s32.totalorder %s10, 0
    %p119 = por %p117, %p118
    %p120 = scmp.ne.s32.totalorder %s109, %s112
    %p121 = scmp.eq.s32.totalorder %s15, 7
    %p122 = por %p120, %p121
    %p123 = scmp.ne.s32.totalorder %s112, %s113
    %p124 = scmp.eq.s32.totalorder %s15, 0
    %p125 = por %p123, %p124
    %p126 = scmp.ne.s32.totalorder %s112, %s113
    %p127 = scmp.eq.s32.totalorder %s16, 7
    %p128 = por %p126, %p127
    %p130 = scmp.ne.s32.totalorder %s113, %s129
    %p131 = scmp.eq.s32.totalorder %s16, 0
    %p132 = por %p130, %p131
    %p133 = scmp.le.s32.totalorder 1, %s10
    %p134 = scmp.lt.s32.totalorder %s10, 9
    %p135 = pnand %p133, %p134
    %p136 = pneg %p135
    // Predicated region
    $region9: #{residual_block_forward.3} parent=5 // pred_check
      _
    $region10: #{residual_block_forward.3} parent=5 // pred_check_branch
      %138 = sbr.rel (%p135) target = $region12
    $region11: #{residual_block_forward.3} parent=5 // pred_region
      %s139 = ssub.s32 %s10, 1
      // Predicated region
      $region13: #{residual_block_forward.3} parent=11 // pred_check
        %p140 = pneg %p57
      $region14: #{residual_block_forward.3} parent=11 // pred_check_branch
        %142 = sbr.rel (%p140) target = $region16
      $region15: #{residual_block_forward.3} parent=11 // pred_region
        _
      $region16: #{residual_block_forward.3} parent=11 // pred_fallthru
        _
      // Predicated region
      $region17: #{residual_block_forward.3} parent=11 // pred_check
        %p143 = pneg %p78
      $region18: #{residual_block_forward.3} parent=11 // pred_check_branch
        %145 = sbr.rel (%p143) target = $region20
      $region19: #{residual_block_forward.3} parent=11 // pred_region
        _
      $region20: #{residual_block_forward.3} parent=11 // pred_fallthru
        _
      // Predicated region
      $region21: #{residual_block_forward.3} parent=11 // pred_check
        %p146 = pneg %p99
      $region22: #{residual_block_forward.3} parent=11 // pred_check_branch
        %148 = sbr.rel (%p146) target = $region24
      $region23: #{residual_block_forward.3} parent=11 // pred_region
        _
      $region24: #{residual_block_forward.3} parent=11 // pred_fallthru
        _
    $region12: #{residual_block_forward.3} parent=5 // pred_fallthru
      _
    %p149 = scmp.lt.s32.totalorder %s10, 8
    // Predicated region
    $region25: #{residual_block_forward.3} parent=5 // pred_check
      %p150 = pneg %p149
    $region26: #{residual_block_forward.3} parent=5 // pred_check_branch
      %152 = sbr.rel (%p150) target = $region28
    $region27: #{residual_block_forward.3} parent=5 // pred_region
      // Predicated region
      $region29: #{residual_block_forward.3} parent=27 // pred_check
        %p153 = pneg %p30
      $region30: #{residual_block_forward.3} parent=27 // pred_check_branch
        %155 = sbr.rel (%p153) target = $region32
      $region31: #{residual_block_forward.3} parent=27 // pred_region
        %s156 = smul.u32 12, %s10
        %p157 = scmp.lt.s32.totalorder %s156, 95
        %s158 = scalar_select %p157, %s156, 95
        %s159 = smul.addr %s158, 8
        %s160 = scalar_lea.vmem %s0, %s159
        %s161 = smul.u32 12, %s10
      $region32: #{residual_block_forward.3} parent=27 // pred_fallthru
        _
    $region28: #{residual_block_forward.3} parent=5 // pred_fallthru
      _
    %p162 = scmp.le.s32.totalorder 1, %s10
    %p163 = scmp.lt.s32.totalorder %s10, 9
    %p164 = pnand %p162, %p163
    %p165 = pneg %p164
    // Predicated region
    $region33: #{residual_block_forward.3} parent=5 // pred_check
      _
    $region34: #{residual_block_forward.3} parent=5 // pred_check_branch
      %167 = sbr.rel (%p164) target = $region36
    $region35: #{residual_block_forward.3} parent=5 // pred_region
      %s168 = ssub.s32 %s10, 1
      %s169 = smul.u32 12, %s15
      %p170 = scmp.lt.s32.totalorder %s169, 95
      %s171 = scalar_select %p170, %s169, 95
      %s172 = smul.addr %s171, 8
      %s173 = scalar_lea.vmem %s0, %s172
      %p174 = pneg %p36
      %p175 = pneg %p33
      %p176 = pneg %p57
      %p177 = pneg %p54
      %p178 = pneg %p78
      %p179 = pneg %p75
      %p180 = pneg %p99
      %p181 = pneg %p96
      %p182 = pneg %p125
      %p183 = pneg %p122
      %s184 = smul.u32 12, %s15
      %p185 = scmp.lt.s32.totalorder %s184, 95
      %s186 = scalar_select %p185, %s184, 95
      %s187 = smul.addr %s186, 9
      %s188 = smul.addr %s187, 8
      %s189 = scalar_lea.vmem %s4, %s188
      %s190 = smul.u32 12, %s15
      %p191 = scmp.lt.s32.totalorder %s190, 95
      %s192 = scalar_select %p191, %s190, 95
      %s193 = smul.addr %s192, 8
      %s194 = scalar_lea.vmem %s0, %s193
      %s195 = smul.u32 12, %s15
      %s196 = smul.u32 12, %s15
      %p197 = scmp.lt.s32.totalorder %s196, 95
      %s198 = scalar_select %p197, %s196, 95
      %s199 = smul.addr %s198, 9
      %s200 = smul.addr %s199, 8
      %s201 = scalar_lea.vmem %s4, %s200
      %s202 = smul.u32 12, %s15
      %v203 = vld [vmem:[%s194] sm:$0xff]
      %v204 = vld [vmem:[%s194 + $0x8] sm:$0xff]
      %v205 = vld [vmem:[%s194 + $0x10] sm:$0xff]
      %v206 = vld [vmem:[%s194 + $0x18] sm:$0xff]
      %v207 = vld [vmem:[%s194 + $0x20] sm:$0xff]
      %v208 = vld [vmem:[%s194 + $0x28] sm:$0xff]
      %v209 = vld [vmem:[%s194 + $0x30] sm:$0xff]
      %v210 = vld [vmem:[%s194 + $0x38] sm:$0xff]
      %v211 = vld [vmem:[%s194 + $0x40] sm:$0xff]
      %v212 = vld [vmem:[%s194 + $0x48] sm:$0xff]
      %v213 = vld [vmem:[%s194 + $0x50] sm:$0xff]
      %v214 = vld [vmem:[%s194 + $0x58] sm:$0xff]
      %v215 = vld [vmem:[%s1] sm:$0x1]
      %v217 = vlaneseq
      %v218 = vshrl.u32 %v217, 7
      %v219 = vsub.s32 0, %v218
      %v220 = vrot.slane %v215, %v219
      %v222 = vmul.f32 %v203, %v220
      %v223 = vmul.f32 %v204, %v220
      %v224 = vmul.f32 %v205, %v220
      %v225 = vmul.f32 %v206, %v220
      %v226 = vmul.f32 %v207, %v220
      %v227 = vmul.f32 %v208, %v220
      %v228 = vmul.f32 %v209, %v220
      %v229 = vmul.f32 %v210, %v220
      %v230 = vmul.f32 %v211, %v220
      %v231 = vmul.f32 %v212, %v220
      %v232 = vmul.f32 %v213, %v220
      %v233 = vmul.f32 %v214, %v220
      %v234 = vld [vmem:[%s2] sm:$0x1]
      %v236 = vlaneseq
      %v237 = vshrl.u32 %v236, 7
      %v238 = vsub.s32 0, %v237
      %v239 = vrot.slane %v234, %v238
      %v241 = vadd.f32 %v222, %v239
      %v242 = vadd.f32 %v223, %v239
      %v243 = vadd.f32 %v224, %v239
      %v244 = vadd.f32 %v225, %v239
      %v245 = vadd.f32 %v226, %v239
      %v246 = vadd.f32 %v227, %v239
      %v247 = vadd.f32 %v228, %v239
      %v248 = vadd.f32 %v229, %v239
      %v249 = vadd.f32 %v230, %v239
      %v250 = vadd.f32 %v231, %v239
      %v251 = vadd.f32 %v232, %v239
      %v252 = vadd.f32 %v233, %v239
      %v253 = vmax.f32 %v241, 0.0
      %v254 = vmax.f32 %v242, 0.0
      %v255 = vmax.f32 %v243, 0.0
      %v256 = vmax.f32 %v244, 0.0
      %v257 = vmax.f32 %v245, 0.0
      %v258 = vmax.f32 %v246, 0.0
      %v259 = vmax.f32 %v247, 0.0
      %v260 = vmax.f32 %v248, 0.0
      %v261 = vmax.f32 %v249, 0.0
      %v262 = vmax.f32 %v250, 0.0
      %v263 = vmax.f32 %v251, 0.0
      %v264 = vmax.f32 %v252, 0.0
      %v265 = vld [vmem:[%s3] sm:$0xff]
      %v266 = vld [vmem:[%s3 + $0x8] sm:$0xff]
      %v267 = vld [vmem:[%s3 + $0x10] sm:$0xff]
      %v268 = vld [vmem:[%s3 + $0x18] sm:$0xff]
      %v269 = vld [vmem:[%s3 + $0x20] sm:$0xff]
      %v270 = vld [vmem:[%s3 + $0x28] sm:$0xff]
      %v271 = vld [vmem:[%s3 + $0x30] sm:$0xff]
      %v272 = vld [vmem:[%s3 + $0x38] sm:$0xff]
      %v273 = vld [vmem:[%s3 + $0x40] sm:$0xff]
      %v274 = vld [vmem:[%s3 + $0x48] sm:$0xff]
      %v275 = vld [vmem:[%s3 + $0x50] sm:$0xff]
      %v276 = vld [vmem:[%s3 + $0x58] sm:$0xff]
      %v277 = vld [vmem:[%s3 + $0x60] sm:$0xff]
      %v278 = vld [vmem:[%s3 + $0x68] sm:$0xff]
      %v279 = vld [vmem:[%s3 + $0x70] sm:$0xff]
      %v280 = vld [vmem:[%s3 + $0x78] sm:$0xff]
      %v281 = vld [vmem:[%s3 + $0x80] sm:$0xff]
      %v282 = vld [vmem:[%s3 + $0x88] sm:$0xff]
      %v283 = vld [vmem:[%s3 + $0x90] sm:$0xff]
      %v284 = vld [vmem:[%s3 + $0x98] sm:$0xff]
      %v285 = vld [vmem:[%s3 + $0xa0] sm:$0xff]
      %v286 = vld [vmem:[%s3 + $0xa8] sm:$0xff]
      %v287 = vld [vmem:[%s3 + $0xb0] sm:$0xff]
      %v288 = vld [vmem:[%s3 + $0xb8] sm:$0xff]
      %v289 = vld [vmem:[%s3 + $0xc0] sm:$0xff]
      %v290 = vld [vmem:[%s3 + $0xc8] sm:$0xff]
      %v291 = vld [vmem:[%s3 + $0xd0] sm:$0xff]
      %v292 = vld [vmem:[%s3 + $0xd8] sm:$0xff]
      %v293 = vld [vmem:[%s3 + $0xe0] sm:$0xff]
      %v294 = vld [vmem:[%s3 + $0xe8] sm:$0xff]
      %v295 = vld [vmem:[%s3 + $0xf0] sm:$0xff]
      %v296 = vld [vmem:[%s3 + $0xf8] sm:$0xff]
      %v297 = vld [vmem:[%s3 + $0x100] sm:$0xff]
      %v298 = vld [vmem:[%s3 + $0x108] sm:$0xff]
      %v299 = vld [vmem:[%s3 + $0x110] sm:$0xff]
      %v300 = vld [vmem:[%s3 + $0x118] sm:$0xff]
      %v301 = vld [vmem:[%s3 + $0x120] sm:$0xff]
      %v302 = vld [vmem:[%s3 + $0x128] sm:$0xff]
      %v303 = vld [vmem:[%s3 + $0x130] sm:$0xff]
      %v304 = vld [vmem:[%s3 + $0x138] sm:$0xff]
      %v305 = vld [vmem:[%s3 + $0x140] sm:$0xff]
      %v306 = vld [vmem:[%s3 + $0x148] sm:$0xff]
      %v307 = vld [vmem:[%s3 + $0x150] sm:$0xff]
      %v308 = vld [vmem:[%s3 + $0x158] sm:$0xff]
      %v309 = vld [vmem:[%s3 + $0x160] sm:$0xff]
      %v310 = vld [vmem:[%s3 + $0x168] sm:$0xff]
      %v311 = vld [vmem:[%s3 + $0x170] sm:$0xff]
      %v312 = vld [vmem:[%s3 + $0x178] sm:$0xff]
      %v313 = vld [vmem:[%s3 + $0x180] sm:$0xff]
      %v314 = vld [vmem:[%s3 + $0x188] sm:$0xff]
      %v315 = vld [vmem:[%s3 + $0x190] sm:$0xff]
      %v316 = vld [vmem:[%s3 + $0x198] sm:$0xff]
      %v317 = vld [vmem:[%s3 + $0x1a0] sm:$0xff]
      %v318 = vld [vmem:[%s3 + $0x1a8] sm:$0xff]
      %v319 = vld [vmem:[%s3 + $0x1b0] sm:$0xff]
      %v320 = vld [vmem:[%s3 + $0x1b8] sm:$0xff]
      %v321 = vld [vmem:[%s3 + $0x1c0] sm:$0xff]
      %v322 = vld [vmem:[%s3 + $0x1c8] sm:$0xff]
      %v323 = vld [vmem:[%s3 + $0x1d0] sm:$0xff]
      %v324 = vld [vmem:[%s3 + $0x1d8] sm:$0xff]
      %v325 = vld [vmem:[%s3 + $0x1e0] sm:$0xff]
      %v326 = vld [vmem:[%s3 + $0x1e8] sm:$0xff]
      %v327 = vld [vmem:[%s3 + $0x1f0] sm:$0xff]
      %v328 = vld [vmem:[%s3 + $0x1f8] sm:$0xff]
      %v329 = vld [vmem:[%s3 + $0x200] sm:$0xff]
      %v330 = vld [vmem:[%s3 + $0x208] sm:$0xff]
      %v331 = vld [vmem:[%s3 + $0x210] sm:$0xff]
      %v332 = vld [vmem:[%s3 + $0x218] sm:$0xff]
      %v333 = vld [vmem:[%s3 + $0x220] sm:$0xff]
      %v334 = vld [vmem:[%s3 + $0x228] sm:$0xff]
      %v335 = vld [vmem:[%s3 + $0x230] sm:$0xff]
      %v336 = vld [vmem:[%s3 + $0x238] sm:$0xff]
      %v337 = vld [vmem:[%s3 + $0x240] sm:$0xff]
      %v338 = vld [vmem:[%s3 + $0x248] sm:$0xff]
      %v339 = vld [vmem:[%s3 + $0x250] sm:$0xff]
      %v340 = vld [vmem:[%s3 + $0x258] sm:$0xff]
      %v341 = vld [vmem:[%s3 + $0x260] sm:$0xff]
      %v342 = vld [vmem:[%s3 + $0x268] sm:$0xff]
      %v343 = vld [vmem:[%s3 + $0x270] sm:$0xff]
      %v344 = vld [vmem:[%s3 + $0x278] sm:$0xff]
      %v345 = vld [vmem:[%s3 + $0x280] sm:$0xff]
      %v346 = vld [vmem:[%s3 + $0x288] sm:$0xff]
      %v347 = vld [vmem:[%s3 + $0x290] sm:$0xff]
      %v348 = vld [vmem:[%s3 + $0x298] sm:$0xff]
      %v349 = vld [vmem:[%s3 + $0x2a0] sm:$0xff]
      %v350 = vld [vmem:[%s3 + $0x2a8] sm:$0xff]
      %v351 = vld [vmem:[%s3 + $0x2b0] sm:$0xff]
      %v352 = vld [vmem:[%s3 + $0x2b8] sm:$0xff]
      %v353 = vld [vmem:[%s3 + $0x2c0] sm:$0xff]
      %v354 = vld [vmem:[%s3 + $0x2c8] sm:$0xff]
      %v355 = vld [vmem:[%s3 + $0x2d0] sm:$0xff]
      %v356 = vld [vmem:[%s3 + $0x2d8] sm:$0xff]
      %v357 = vld [vmem:[%s3 + $0x2e0] sm:$0xff]
      %v358 = vld [vmem:[%s3 + $0x2e8] sm:$0xff]
      %v359 = vld [vmem:[%s3 + $0x2f0] sm:$0xff]
      %v360 = vld [vmem:[%s3 + $0x2f8] sm:$0xff]
      %v361 = vld [vmem:[%s3 + $0x300] sm:$0xff]
      %v362 = vld [vmem:[%s3 + $0x308] sm:$0xff]
      %v363 = vld [vmem:[%s3 + $0x310] sm:$0xff]
      %v364 = vld [vmem:[%s3 + $0x318] sm:$0xff]
      %v365 = vld [vmem:[%s3 + $0x320] sm:$0xff]
      %v366 = vld [vmem:[%s3 + $0x328] sm:$0xff]
      %v367 = vld [vmem:[%s3 + $0x330] sm:$0xff]
      %v368 = vld [vmem:[%s3 + $0x338] sm:$0xff]
      %v369 = vld [vmem:[%s3 + $0x340] sm:$0xff]
      %v370 = vld [vmem:[%s3 + $0x348] sm:$0xff]
      %v371 = vld [vmem:[%s3 + $0x350] sm:$0xff]
      %v372 = vld [vmem:[%s3 + $0x358] sm:$0xff]
      %v373 = vld [vmem:[%s3 + $0x360] sm:$0xff]
      %v374 = vld [vmem:[%s3 + $0x368] sm:$0xff]
      %v375 = vld [vmem:[%s3 + $0x370] sm:$0xff]
      %v376 = vld [vmem:[%s3 + $0x378] sm:$0xff]
      %v377 = vld [vmem:[%s3 + $0x380] sm:$0xff]
      %v378 = vld [vmem:[%s3 + $0x388] sm:$0xff]
      %v379 = vld [vmem:[%s3 + $0x390] sm:$0xff]
      %v380 = vld [vmem:[%s3 + $0x398] sm:$0xff]
      %v381 = vld [vmem:[%s3 + $0x3a0] sm:$0xff]
      %v382 = vld [vmem:[%s3 + $0x3a8] sm:$0xff]
      %v383 = vld [vmem:[%s3 + $0x3b0] sm:$0xff]
      %v384 = vld [vmem:[%s3 + $0x3b8] sm:$0xff]
      %v385 = vld [vmem:[%s3 + $0x3c0] sm:$0xff]
      %v386 = vld [vmem:[%s3 + $0x3c8] sm:$0xff]
      %v387 = vld [vmem:[%s3 + $0x3d0] sm:$0xff]
      %v388 = vld [vmem:[%s3 + $0x3d8] sm:$0xff]
      %v389 = vld [vmem:[%s3 + $0x3e0] sm:$0xff]
      %v390 = vld [vmem:[%s3 + $0x3e8] sm:$0xff]
      %v391 = vld [vmem:[%s3 + $0x3f0] sm:$0xff]
      %v392 = vld [vmem:[%s3 + $0x3f8] sm:$0xff]
      %v393 = vld [vmem:[%s3 + $0x400] sm:$0xff]
      %v394 = vld [vmem:[%s3 + $0x408] sm:$0xff]
      %v395 = vld [vmem:[%s3 + $0x410] sm:$0xff]
      %v396 = vld [vmem:[%s3 + $0x418] sm:$0xff]
      %v397 = vld [vmem:[%s3 + $0x420] sm:$0xff]
      %v398 = vld [vmem:[%s3 + $0x428] sm:$0xff]
      %v399 = vld [vmem:[%s3 + $0x430] sm:$0xff]
      %v400 = vld [vmem:[%s3 + $0x438] sm:$0xff]
      %v401 = vld [vmem:[%s3 + $0x440] sm:$0xff]
      %v402 = vld [vmem:[%s3 + $0x448] sm:$0xff]
      %v403 = vld [vmem:[%s3 + $0x450] sm:$0xff]
      %v404 = vld [vmem:[%s3 + $0x458] sm:$0xff]
      %v405 = vld [vmem:[%s3 + $0x460] sm:$0xff]
      %v406 = vld [vmem:[%s3 + $0x468] sm:$0xff]
      %v407 = vld [vmem:[%s3 + $0x470] sm:$0xff]
      %v408 = vld [vmem:[%s3 + $0x478] sm:$0xff]
      %409 = vmatprep.subr.mxu0 %v401
      %410 = vmatpush1.msra.mxu0 %v400
      %411 = vmatprep.subr.mxu0 %v392
      %412 = vmatpush1.msra.mxu0 %v391
      %413 = vmatprep.subr.mxu0 %v383
      %414 = vmatpush1.msra.mxu0 %v382
      %415 = vmatprep.subr.mxu0 %v374
      %416 = vmatpush1.msra.mxu0 %v373
      %417 = vmatprep.subr.mxu0 %v365
      %418 = vmatpush1.msra.mxu0 %v364
      %419 = vmatprep.subr.mxu0 %v356
      %420 = vmatpush1.msra.mxu0 %v355
      %421 = vmatprep.subr.mxu0 %v347
      %422 = vmatpush1.msra.mxu0 %v346
      %423 = vmatprep.subr.mxu0 %v338
      %424 = vmatpush1.msra.mxu0 %v337
      %425 = vmatprep.subr.mxu0 %v329
      %426 = vmatpush1.msra.mxu0 %v328
      %427 = vmatprep.subr.mxu0 %v320
      %428 = vmatpush1.msra.mxu0 %v319
      %429 = vmatprep.subr.mxu0 %v311
      %430 = vmatpush1.msra.mxu0 %v310
      %431 = vmatprep.subr.mxu0 %v302
      %432 = vmatpush1.msra.mxu0 %v301
      %433 = vmatprep.subr.mxu0 %v293
      %434 = vmatpush1.msra.mxu0 %v292
      %435 = vmatprep.subr.mxu0 %v284
      %436 = vmatpush1.msra.mxu0 %v283
      %437 = vmatprep.subr.mxu0 %v275
      %438 = vmatpush1.msra.mxu0 %v274
      %439 = vmatprep.subr.mxu0 %v266
      %440 = vmatpush1.msra.mxu0 %v265
      %441 = vmatprep.subr.mxu0 0.0
      %442 = vmatpush2.msra.mxu0 0.0
      %443 = vmatprep.subr.mxu0 0.0
      %444 = vmatpush2.msra.mxu0 0.0
      %445 = vmatprep.subr.mxu0 0.0
      %446 = vmatpush2.msra.mxu0 0.0
      %447 = vmatprep.subr.mxu0 0.0
      %448 = vmatpush2.msra.mxu0 0.0
      %449 = vmatprep.subr.mxu0 0.0
      %450 = vmatpush2.msra.mxu0 0.0
      %451 = vmatprep.subr.mxu0 0.0
      %452 = vmatpush2.msra.mxu0 0.0
      %453 = vmatprep.subr.mxu0 0.0
      %454 = vmatpush2.msra.mxu0 0.0
      %455 = vmatprep.subr.mxu0 0.0
      %456 = vmatpush2.msra.mxu0 0.0
      %457 = vmatprep.subr.mxu0 0.0
      %458 = vmatpush2.msra.mxu0 0.0
      %459 = vmatprep.subr.mxu0 0.0
      %460 = vmatpush2.msra.mxu0 0.0
      %461 = vmatprep.subr.mxu0 0.0
      %462 = vmatpush2.msra.mxu0 0.0
      %463 = vmatprep.subr.mxu0 0.0
      %464 = vmatpush2.msra.mxu0 0.0
      %465 = vmatprep.subr.mxu0 0.0
      %466 = vmatpush2.msra.mxu0 0.0
      %467 = vmatprep.subr.mxu0 0.0
      %468 = vmatpush2.msra.mxu0 0.0
      %469 = vmatprep.subr.mxu0 0.0
      %470 = vmatpush2.msra.mxu0 0.0
      %471 = vmatprep.subr.mxu0 0.0
      %472 = vmatpush2.msra.mxu0 0.0
      %473 = vmatprep.mubr.f32.mxu0 0.0
      %474 = vmatmul.mubr.f32.gmra.mxu0 %v253
      %v475 = vpop.f32.mrf.mxu0
      %v476 = vadd.f32 0.0, %v475
      %v477 = vpop.f32.mrf.mxu0
      %v478 = vadd.f32 0.0, %v477
      %479 = vmatprep.mubr.f32.mxu0 0.0
      %480 = vmatmul.mubr.f32.gmra.mxu0 %v254
      %v481 = vpop.f32.mrf.mxu0
      %v482 = vadd.f32 0.0, %v481
      %v483 = vpop.f32.mrf.mxu0
      %v484 = vadd.f32 0.0, %v483
      %485 = vmatprep.mubr.f32.mxu0 0.0
      %486 = vmatmul.mubr.f32.gmra.mxu0 %v255
      %v487 = vpop.f32.mrf.mxu0
      %v488 = vadd.f32 0.0, %v487
      %v489 = vpop.f32.mrf.mxu0
      %v490 = vadd.f32 0.0, %v489
      %491 = vmatprep.mubr.f32.mxu0 0.0
      %492 = vmatmul.mubr.f32.gmra.mxu0 %v256
      %v493 = vpop.f32.mrf.mxu0
      %v494 = vadd.f32 0.0, %v493
      %v495 = vpop.f32.mrf.mxu0
      %v496 = vadd.f32 0.0, %v495
      %497 = vmatprep.mubr.f32.mxu0 0.0
      %498 = vmatmul.mubr.f32.gmra.mxu0 %v257
      %v499 = vpop.f32.mrf.mxu0
      %v500 = vadd.f32 0.0, %v499
      %v501 = vpop.f32.mrf.mxu0
      %v502 = vadd.f32 0.0, %v501
      %503 = vmatprep.mubr.f32.mxu0 0.0
      %504 = vmatmul.mubr.f32.gmra.mxu0 %v258
      %v505 = vpop.f32.mrf.mxu0
      %v506 = vadd.f32 0.0, %v505
      %v507 = vpop.f32.mrf.mxu0
      %v508 = vadd.f32 0.0, %v507
      %509 = vmatprep.mubr.f32.mxu0 0.0
      %510 = vmatmul.mubr.f32.gmra.mxu0 %v259
      %v511 = vpop.f32.mrf.mxu0
      %v512 = vadd.f32 0.0, %v511
      %v513 = vpop.f32.mrf.mxu0
      %v514 = vadd.f32 0.0, %v513
      %515 = vmatprep.mubr.f32.mxu0 0.0
      %516 = vmatmul.mubr.f32.gmra.mxu0 %v260
      %v517 = vpop.f32.mrf.mxu0
      %v518 = vadd.f32 0.0, %v517
      %v519 = vpop.f32.mrf.mxu0
      %v520 = vadd.f32 0.0, %v519
      %521 = vmatprep.mubr.f32.mxu0 0.0
      %522 = vmatmul.mubr.f32.gmra.mxu0 %v261
      %v523 = vpop.f32.mrf.mxu0
      %v524 = vadd.f32 0.0, %v523
      %v525 = vpop.f32.mrf.mxu0
      %v526 = vadd.f32 0.0, %v525
      %527 = vmatprep.mubr.f32.mxu0 0.0
      %528 = vmatmul.mubr.f32.gmra.mxu0 %v262
      %v529 = vpop.f32.mrf.mxu0
      %v530 = vadd.f32 0.0, %v529
      %v531 = vpop.f32.mrf.mxu0
      %v532 = vadd.f32 0.0, %v531
      %533 = vmatprep.mubr.f32.mxu0 0.0
      %534 = vmatmul.mubr.f32.gmra.mxu0 %v263
      %v535 = vpop.f32.mrf.mxu0
      %v536 = vadd.f32 0.0, %v535
      %v537 = vpop.f32.mrf.mxu0
      %v538 = vadd.f32 0.0, %v537
      %539 = vmatprep.mubr.f32.mxu0 0.0
      %540 = vmatmul.mubr.f32.gmra.mxu0 %v264
      %v541 = vpop.f32.mrf.mxu0
      %v542 = vadd.f32 0.0, %v541
      %v543 = vpop.f32.mrf.mxu0
      %v544 = vadd.f32 0.0, %v543
      %545 = vdwg.mxu0
      %546 = vmatprep.subr.mxu0 %v403
      %547 = vmatpush1.msra.mxu0 %v402
      %548 = vmatprep.subr.mxu0 %v394
      %549 = vmatpush1.msra.mxu0 %v393
      %550 = vmatprep.subr.mxu0 %v385
      %551 = vmatpush1.msra.mxu0 %v384
      %552 = vmatprep.subr.mxu0 %v376
      %553 = vmatpush1.msra.mxu0 %v375
      %554 = vmatprep.subr.mxu0 %v367
      %555 = vmatpush1.msra.mxu0 %v366
      %556 = vmatprep.subr.mxu0 %v358
      %557 = vmatpush1.msra.mxu0 %v357
      %558 = vmatprep.subr.mxu0 %v349
      %559 = vmatpush1.msra.mxu0 %v348
      %560 = vmatprep.subr.mxu0 %v340
      %561 = vmatpush1.msra.mxu0 %v339
      %562 = vmatprep.subr.mxu0 %v331
      %563 = vmatpush1.msra.mxu0 %v330
      %564 = vmatprep.subr.mxu0 %v322
      %565 = vmatpush1.msra.mxu0 %v321
      %566 = vmatprep.subr.mxu0 %v313
      %567 = vmatpush1.msra.mxu0 %v312
      %568 = vmatprep.subr.mxu0 %v304
      %569 = vmatpush1.msra.mxu0 %v303
      %570 = vmatprep.subr.mxu0 %v295
      %571 = vmatpush1.msra.mxu0 %v294
      %572 = vmatprep.subr.mxu0 %v286
      %573 = vmatpush1.msra.mxu0 %v285
      %574 = vmatprep.subr.mxu0 %v277
      %575 = vmatpush1.msra.mxu0 %v276
      %576 = vmatprep.subr.mxu0 %v268
      %577 = vmatpush1.msra.mxu0 %v267
      %578 = vmatprep.subr.mxu0 0.0
      %579 = vmatpush2.msra.mxu0 0.0
      %580 = vmatprep.subr.mxu0 0.0
      %581 = vmatpush2.msra.mxu0 0.0
      %582 = vmatprep.subr.mxu0 0.0
      %583 = vmatpush2.msra.mxu0 0.0
      %584 = vmatprep.subr.mxu0 0.0
      %585 = vmatpush2.msra.mxu0 0.0
      %586 = vmatprep.subr.mxu0 0.0
      %587 = vmatpush2.msra.mxu0 0.0
      %588 = vmatprep.subr.mxu0 0.0
      %589 = vmatpush2.msra.mxu0 0.0
      %590 = vmatprep.subr.mxu0 0.0
      %591 = vmatpush2.msra.mxu0 0.0
      %592 = vmatprep.subr.mxu0 0.0
      %593 = vmatpush2.msra.mxu0 0.0
      %594 = vmatprep.subr.mxu0 0.0
      %595 = vmatpush2.msra.mxu0 0.0
      %596 = vmatprep.subr.mxu0 0.0
      %597 = vmatpush2.msra.mxu0 0.0
      %598 = vmatprep.subr.mxu0 0.0
      %599 = vmatpush2.msra.mxu0 0.0
      %600 = vmatprep.subr.mxu0 0.0
      %601 = vmatpush2.msra.mxu0 0.0
      %602 = vmatprep.subr.mxu0 0.0
      %603 = vmatpush2.msra.mxu0 0.0
      %604 = vmatprep.subr.mxu0 0.0
      %605 = vmatpush2.msra.mxu0 0.0
      %606 = vmatprep.subr.mxu0 0.0
      %607 = vmatpush2.msra.mxu0 0.0
      %608 = vmatprep.subr.mxu0 0.0
      %609 = vmatpush2.msra.mxu0 0.0
      %610 = vmatprep.mubr.f32.mxu0 0.0
      %611 = vmatmul.mubr.f32.gmra.mxu0 %v253
      %v612 = vpop.f32.mrf.mxu0
      %v613 = vadd.f32 0.0, %v612
      %v614 = vpop.f32.mrf.mxu0
      %v615 = vadd.f32 0.0, %v614
      %616 = vmatprep.mubr.f32.mxu0 0.0
      %617 = vmatmul.mubr.f32.gmra.mxu0 %v254
      %v618 = vpop.f32.mrf.mxu0
      %v619 = vadd.f32 0.0, %v618
      %v620 = vpop.f32.mrf.mxu0
      %v621 = vadd.f32 0.0, %v620
      %622 = vmatprep.mubr.f32.mxu0 0.0
      %623 = vmatmul.mubr.f32.gmra.mxu0 %v255
      %v624 = vpop.f32.mrf.mxu0
      %v625 = vadd.f32 0.0, %v624
      %v626 = vpop.f32.mrf.mxu0
      %v627 = vadd.f32 0.0, %v626
      %628 = vmatprep.mubr.f32.mxu0 0.0
      %629 = vmatmul.mubr.f32.gmra.mxu0 %v256
      %v630 = vpop.f32.mrf.mxu0
      %v631 = vadd.f32 0.0, %v630
      %v632 = vpop.f32.mrf.mxu0
      %v633 = vadd.f32 0.0, %v632
      %634 = vmatprep.mubr.f32.mxu0 0.0
      %635 = vmatmul.mubr.f32.gmra.mxu0 %v257
      %v636 = vpop.f32.mrf.mxu0
      %v637 = vadd.f32 0.0, %v636
      %v638 = vpop.f32.mrf.mxu0
      %v639 = vadd.f32 0.0, %v638
      %640 = vmatprep.mubr.f32.mxu0 0.0
      %641 = vmatmul.mubr.f32.gmra.mxu0 %v258
      %v642 = vpop.f32.mrf.mxu0
      %v643 = vadd.f32 0.0, %v642
      %v644 = vpop.f32.mrf.mxu0
      %v645 = vadd.f32 0.0, %v644
      %646 = vmatprep.mubr.f32.mxu0 0.0
      %647 = vmatmul.mubr.f32.gmra.mxu0 %v259
      %v648 = vpop.f32.mrf.mxu0
      %v649 = vadd.f32 0.0, %v648
      %v650 = vpop.f32.mrf.mxu0
      %v651 = vadd.f32 0.0, %v650
      %652 = vmatprep.mubr.f32.mxu0 0.0
      %653 = vmatmul.mubr.f32.gmra.mxu0 %v260
      %v654 = vpop.f32.mrf.mxu0
      %v655 = vadd.f32 0.0, %v654
      %v656 = vpop.f32.mrf.mxu0
      %v657 = vadd.f32 0.0, %v656
      %658 = vmatprep.mubr.f32.mxu0 0.0
      %659 = vmatmul.mubr.f32.gmra.mxu0 %v261
      %v660 = vpop.f32.mrf.mxu0
      %v661 = vadd.f32 0.0, %v660
      %v662 = vpop.f32.mrf.mxu0
      %v663 = vadd.f32 0.0, %v662
      %664 = vmatprep.mubr.f32.mxu0 0.0
      %665 = vmatmul.mubr.f32.gmra.mxu0 %v262
      %v666 = vpop.f32.mrf.mxu0
      %v667 = vadd.f32 0.0, %v666
      %v668 = vpop.f32.mrf.mxu0
      %v669 = vadd.f32 0.0, %v668
      %670 = vmatprep.mubr.f32.mxu0 0.0
      %671 = vmatmul.mubr.f32.gmra.mxu0 %v263
      %v672 = vpop.f32.mrf.mxu0
      %v673 = vadd.f32 0.0, %v672
      %v674 = vpop.f32.mrf.mxu0
      %v675 = vadd.f32 0.0, %v674
      %676 = vmatprep.mubr.f32.mxu0 0.0
      %677 = vmatmul.mubr.f32.gmra.mxu0 %v264
      %v678 = vpop.f32.mrf.mxu0
      %v679 = vadd.f32 0.0, %v678
      %v680 = vpop.f32.mrf.mxu0
      %v681 = vadd.f32 0.0, %v680
      %682 = vdwg.mxu0
      %683 = vmatprep.subr.mxu0 %v405
      %684 = vmatpush1.msra.mxu0 %v404
      %685 = vmatprep.subr.mxu0 %v396
      %686 = vmatpush1.msra.mxu0 %v395
      %687 = vmatprep.subr.mxu0 %v387
      %688 = vmatpush1.msra.mxu0 %v386
      %689 = vmatprep.subr.mxu0 %v378
      %690 = vmatpush1.msra.mxu0 %v377
      %691 = vmatprep.subr.mxu0 %v369
      %692 = vmatpush1.msra.mxu0 %v368
      %693 = vmatprep.subr.mxu0 %v360
      %694 = vmatpush1.msra.mxu0 %v359
      %695 = vmatprep.subr.mxu0 %v351
      %696 = vmatpush1.msra.mxu0 %v350
      %697 = vmatprep.subr.mxu0 %v342
      %698 = vmatpush1.msra.mxu0 %v341
      %699 = vmatprep.subr.mxu0 %v333
      %700 = vmatpush1.msra.mxu0 %v332
      %701 = vmatprep.subr.mxu0 %v324
      %702 = vmatpush1.msra.mxu0 %v323
      %703 = vmatprep.subr.mxu0 %v315
      %704 = vmatpush1.msra.mxu0 %v314
      %705 = vmatprep.subr.mxu0 %v306
      %706 = vmatpush1.msra.mxu0 %v305
      %707 = vmatprep.subr.mxu0 %v297
      %708 = vmatpush1.msra.mxu0 %v296
      %709 = vmatprep.subr.mxu0 %v288
      %710 = vmatpush1.msra.mxu0 %v287
      %711 = vmatprep.subr.mxu0 %v279
      %712 = vmatpush1.msra.mxu0 %v278
      %713 = vmatprep.subr.mxu0 %v270
      %714 = vmatpush1.msra.mxu0 %v269
      %715 = vmatprep.subr.mxu0 0.0
      %716 = vmatpush2.msra.mxu0 0.0
      %717 = vmatprep.subr.mxu0 0.0
      %718 = vmatpush2.msra.mxu0 0.0
      %719 = vmatprep.subr.mxu0 0.0
      %720 = vmatpush2.msra.mxu0 0.0
      %721 = vmatprep.subr.mxu0 0.0
      %722 = vmatpush2.msra.mxu0 0.0
      %723 = vmatprep.subr.mxu0 0.0
      %724 = vmatpush2.msra.mxu0 0.0
      %725 = vmatprep.subr.mxu0 0.0
      %726 = vmatpush2.msra.mxu0 0.0
      %727 = vmatprep.subr.mxu0 0.0
      %728 = vmatpush2.msra.mxu0 0.0
      %729 = vmatprep.subr.mxu0 0.0
      %730 = vmatpush2.msra.mxu0 0.0
      %731 = vmatprep.subr.mxu0 0.0
      %732 = vmatpush2.msra.mxu0 0.0
      %733 = vmatprep.subr.mxu0 0.0
      %734 = vmatpush2.msra.mxu0 0.0
      %735 = vmatprep.subr.mxu0 0.0
      %736 = vmatpush2.msra.mxu0 0.0
      %737 = vmatprep.subr.mxu0 0.0
      %738 = vmatpush2.msra.mxu0 0.0
      %739 = vmatprep.subr.mxu0 0.0
      %740 = vmatpush2.msra.mxu0 0.0
      %741 = vmatprep.subr.mxu0 0.0
      %742 = vmatpush2.msra.mxu0 0.0
      %743 = vmatprep.subr.mxu0 0.0
      %744 = vmatpush2.msra.mxu0 0.0
      %745 = vmatprep.subr.mxu0 0.0
      %746 = vmatpush2.msra.mxu0 0.0
      %747 = vmatprep.mubr.f32.mxu0 0.0
      %748 = vmatmul.mubr.f32.gmra.mxu0 %v253
      %v749 = vpop.f32.mrf.mxu0
      %v750 = vadd.f32 0.0, %v749
      %v751 = vpop.f32.mrf.mxu0
      %v752 = vadd.f32 0.0, %v751
      %753 = vmatprep.mubr.f32.mxu0 0.0
      %754 = vmatmul.mubr.f32.gmra.mxu0 %v254
      %v755 = vpop.f32.mrf.mxu0
      %v756 = vadd.f32 0.0, %v755
      %v757 = vpop.f32.mrf.mxu0
      %v758 = vadd.f32 0.0, %v757
      %759 = vmatprep.mubr.f32.mxu0 0.0
      %760 = vmatmul.mubr.f32.gmra.mxu0 %v255
      %v761 = vpop.f32.mrf.mxu0
      %v762 = vadd.f32 0.0, %v761
      %v763 = vpop.f32.mrf.mxu0
      %v764 = vadd.f32 0.0, %v763
      %765 = vmatprep.mubr.f32.mxu0 0.0
      %766 = vmatmul.mubr.f32.gmra.mxu0 %v256
      %v767 = vpop.f32.mrf.mxu0
      %v768 = vadd.f32 0.0, %v767
      %v769 = vpop.f32.mrf.mxu0
      %v770 = vadd.f32 0.0, %v769
      %771 = vmatprep.mubr.f32.mxu0 0.0
      %772 = vmatmul.mubr.f32.gmra.mxu0 %v257
      %v773 = vpop.f32.mrf.mxu0
      %v774 = vadd.f32 0.0, %v773
      %v775 = vpop.f32.mrf.mxu0
      %v776 = vadd.f32 0.0, %v775
      %777 = vmatprep.mubr.f32.mxu0 0.0
      %778 = vmatmul.mubr.f32.gmra.mxu0 %v258
      %v779 = vpop.f32.mrf.mxu0
      %v780 = vadd.f32 0.0, %v779
      %v781 = vpop.f32.mrf.mxu0
      %v782 = vadd.f32 0.0, %v781
      %783 = vmatprep.mubr.f32.mxu0 0.0
      %784 = vmatmul.mubr.f32.gmra.mxu0 %v259
      %v785 = vpop.f32.mrf.mxu0
      %v786 = vadd.f32 0.0, %v785
      %v787 = vpop.f32.mrf.mxu0
      %v788 = vadd.f32 0.0, %v787
      %789 = vmatprep.mubr.f32.mxu0 0.0
      %790 = vmatmul.mubr.f32.gmra.mxu0 %v260
      %v791 = vpop.f32.mrf.mxu0
      %v792 = vadd.f32 0.0, %v791
      %v793 = vpop.f32.mrf.mxu0
      %v794 = vadd.f32 0.0, %v793
      %795 = vmatprep.mubr.f32.mxu0 0.0
      %796 = vmatmul.mubr.f32.gmra.mxu0 %v261
      %v797 = vpop.f32.mrf.mxu0
      %v798 = vadd.f32 0.0, %v797
      %v799 = vpop.f32.mrf.mxu0
      %v800 = vadd.f32 0.0, %v799
      %801 = vmatprep.mubr.f32.mxu0 0.0
      %802 = vmatmul.mubr.f32.gmra.mxu0 %v262
      %v803 = vpop.f32.mrf.mxu0
      %v804 = vadd.f32 0.0, %v803
      %v805 = vpop.f32.mrf.mxu0
      %v806 = vadd.f32 0.0, %v805
      %807 = vmatprep.mubr.f32.mxu0 0.0
      %808 = vmatmul.mubr.f32.gmra.mxu0 %v263
      %v809 = vpop.f32.mrf.mxu0
      %v810 = vadd.f32 0.0, %v809
      %v811 = vpop.f32.mrf.mxu0
      %v812 = vadd.f32 0.0, %v811
      %813 = vmatprep.mubr.f32.mxu0 0.0
      %814 = vmatmul.mubr.f32.gmra.mxu0 %v264
      %v815 = vpop.f32.mrf.mxu0
      %v816 = vadd.f32 0.0, %v815
      %v817 = vpop.f32.mrf.mxu0
      %v818 = vadd.f32 0.0, %v817
      %819 = vdwg.mxu0
      %820 = vmatprep.subr.mxu0 %v407
      %821 = vmatpush1.msra.mxu0 %v406
      %822 = vmatprep.subr.mxu0 %v398
      %823 = vmatpush1.msra.mxu0 %v397
      %824 = vmatprep.subr.mxu0 %v389
      %825 = vmatpush1.msra.mxu0 %v388
      %826 = vmatprep.subr.mxu0 %v380
      %827 = vmatpush1.msra.mxu0 %v379
      %828 = vmatprep.subr.mxu0 %v371
      %829 = vmatpush1.msra.mxu0 %v370
      %830 = vmatprep.subr.mxu0 %v362
      %831 = vmatpush1.msra.mxu0 %v361
      %832 = vmatprep.subr.mxu0 %v353
      %833 = vmatpush1.msra.mxu0 %v352
      %834 = vmatprep.subr.mxu0 %v344
      %835 = vmatpush1.msra.mxu0 %v343
      %836 = vmatprep.subr.mxu0 %v335
      %837 = vmatpush1.msra.mxu0 %v334
      %838 = vmatprep.subr.mxu0 %v326
      %839 = vmatpush1.msra.mxu0 %v325
      %840 = vmatprep.subr.mxu0 %v317
      %841 = vmatpush1.msra.mxu0 %v316
      %842 = vmatprep.subr.mxu0 %v308
      %843 = vmatpush1.msra.mxu0 %v307
      %844 = vmatprep.subr.mxu0 %v299
      %845 = vmatpush1.msra.mxu0 %v298
      %846 = vmatprep.subr.mxu0 %v290
      %847 = vmatpush1.msra.mxu0 %v289
      %848 = vmatprep.subr.mxu0 %v281
      %849 = vmatpush1.msra.mxu0 %v280
      %850 = vmatprep.subr.mxu0 %v272
      %851 = vmatpush1.msra.mxu0 %v271
      %852 = vmatprep.subr.mxu0 0.0
      %853 = vmatpush2.msra.mxu0 0.0
      %854 = vmatprep.subr.mxu0 0.0
      %855 = vmatpush2.msra.mxu0 0.0
      %856 = vmatprep.subr.mxu0 0.0
      %857 = vmatpush2.msra.mxu0 0.0
      %858 = vmatprep.subr.mxu0 0.0
      %859 = vmatpush2.msra.mxu0 0.0
      %860 = vmatprep.subr.mxu0 0.0
      %861 = vmatpush2.msra.mxu0 0.0
      %862 = vmatprep.subr.mxu0 0.0
      %863 = vmatpush2.msra.mxu0 0.0
      %864 = vmatprep.subr.mxu0 0.0
      %865 = vmatpush2.msra.mxu0 0.0
      %866 = vmatprep.subr.mxu0 0.0
      %867 = vmatpush2.msra.mxu0 0.0
      %868 = vmatprep.subr.mxu0 0.0
      %869 = vmatpush2.msra.mxu0 0.0
      %870 = vmatprep.subr.mxu0 0.0
      %871 = vmatpush2.msra.mxu0 0.0
      %872 = vmatprep.subr.mxu0 0.0
      %873 = vmatpush2.msra.mxu0 0.0
      %874 = vmatprep.subr.mxu0 0.0
      %875 = vmatpush2.msra.mxu0 0.0
      %876 = vmatprep.subr.mxu0 0.0
      %877 = vmatpush2.msra.mxu0 0.0
      %878 = vmatprep.subr.mxu0 0.0
      %879 = vmatpush2.msra.mxu0 0.0
      %880 = vmatprep.subr.mxu0 0.0
      %881 = vmatpush2.msra.mxu0 0.0
      %882 = vmatprep.subr.mxu0 0.0
      %883 = vmatpush2.msra.mxu0 0.0
      %884 = vmatprep.mubr.f32.mxu0 0.0
      %885 = vmatmul.mubr.f32.gmra.mxu0 %v253
      %v886 = vpop.f32.mrf.mxu0
      %v887 = vadd.f32 0.0, %v886
      %v888 = vpop.f32.mrf.mxu0
      %v889 = vadd.f32 0.0, %v888
      %890 = vmatprep.mubr.f32.mxu0 0.0
      %891 = vmatmul.mubr.f32.gmra.mxu0 %v254
      %v892 = vpop.f32.mrf.mxu0
      %v893 = vadd.f32 0.0, %v892
      %v894 = vpop.f32.mrf.mxu0
      %v895 = vadd.f32 0.0, %v894
      %896 = vmatprep.mubr.f32.mxu0 0.0
      %897 = vmatmul.mubr.f32.gmra.mxu0 %v255
      %v898 = vpop.f32.mrf.mxu0
      %v899 = vadd.f32 0.0, %v898
      %v900 = vpop.f32.mrf.mxu0
      %v901 = vadd.f32 0.0, %v900
      %902 = vmatprep.mubr.f32.mxu0 0.0
      %903 = vmatmul.mubr.f32.gmra.mxu0 %v256
      %v904 = vpop.f32.mrf.mxu0
      %v905 = vadd.f32 0.0, %v904
      %v906 = vpop.f32.mrf.mxu0
      %v907 = vadd.f32 0.0, %v906
      %908 = vmatprep.mubr.f32.mxu0 0.0
      %909 = vmatmul.mubr.f32.gmra.mxu0 %v257
      %v910 = vpop.f32.mrf.mxu0
      %v911 = vadd.f32 0.0, %v910
      %v912 = vpop.f32.mrf.mxu0
      %v913 = vadd.f32 0.0, %v912
      %914 = vmatprep.mubr.f32.mxu0 0.0
      %915 = vmatmul.mubr.f32.gmra.mxu0 %v258
      %v916 = vpop.f32.mrf.mxu0
      %v917 = vadd.f32 0.0, %v916
      %v918 = vpop.f32.mrf.mxu0
      %v919 = vadd.f32 0.0, %v918
      %920 = vmatprep.mubr.f32.mxu0 0.0
      %921 = vmatmul.mubr.f32.gmra.mxu0 %v259
      %v922 = vpop.f32.mrf.mxu0
      %v923 = vadd.f32 0.0, %v922
      %v924 = vpop.f32.mrf.mxu0
      %v925 = vadd.f32 0.0, %v924
      %926 = vmatprep.mubr.f32.mxu0 0.0
      %927 = vmatmul.mubr.f32.gmra.mxu0 %v260
      %v928 = vpop.f32.mrf.mxu0
      %v929 = vadd.f32 0.0, %v928
      %v930 = vpop.f32.mrf.mxu0
      %v931 = vadd.f32 0.0, %v930
      %932 = vmatprep.mubr.f32.mxu0 0.0
      %933 = vmatmul.mubr.f32.gmra.mxu0 %v261
      %v934 = vpop.f32.mrf.mxu0
      %v935 = vadd.f32 0.0, %v934
      %v936 = vpop.f32.mrf.mxu0
      %v937 = vadd.f32 0.0, %v936
      %938 = vmatprep.mubr.f32.mxu0 0.0
      %939 = vmatmul.mubr.f32.gmra.mxu0 %v262
      %v940 = vpop.f32.mrf.mxu0
      %v941 = vadd.f32 0.0, %v940
      %v942 = vpop.f32.mrf.mxu0
      %v943 = vadd.f32 0.0, %v942
      %944 = vmatprep.mubr.f32.mxu0 0.0
      %945 = vmatmul.mubr.f32.gmra.mxu0 %v263
      %v946 = vpop.f32.mrf.mxu0
      %v947 = vadd.f32 0.0, %v946
      %v948 = vpop.f32.mrf.mxu0
      %v949 = vadd.f32 0.0, %v948
      %950 = vmatprep.mubr.f32.mxu0 0.0
      %951 = vmatmul.mubr.f32.gmra.mxu0 %v264
      %v952 = vpop.f32.mrf.mxu0
      %v953 = vadd.f32 0.0, %v952
      %v954 = vpop.f32.mrf.mxu0
      %v955 = vadd.f32 0.0, %v954
      %956 = vdwg.mxu0
      %957 = vmatprep.subr.mxu0 0.0
      %958 = vmatpush1.msra.mxu0 %v408
      %959 = vmatprep.subr.mxu0 0.0
      %960 = vmatpush1.msra.mxu0 %v399
      %961 = vmatprep.subr.mxu0 0.0
      %962 = vmatpush1.msra.mxu0 %v390
      %963 = vmatprep.subr.mxu0 0.0
      %964 = vmatpush1.msra.mxu0 %v381
      %965 = vmatprep.subr.mxu0 0.0
      %966 = vmatpush1.msra.mxu0 %v372
      %967 = vmatprep.subr.mxu0 0.0
      %968 = vmatpush1.msra.mxu0 %v363
      %969 = vmatprep.subr.mxu0 0.0
      %970 = vmatpush1.msra.mxu0 %v354
      %971 = vmatprep.subr.mxu0 0.0
      %972 = vmatpush1.msra.mxu0 %v345
      %973 = vmatprep.subr.mxu0 0.0
      %974 = vmatpush1.msra.mxu0 %v336
      %975 = vmatprep.subr.mxu0 0.0
      %976 = vmatpush1.msra.mxu0 %v327
      %977 = vmatprep.subr.mxu0 0.0
      %978 = vmatpush1.msra.mxu0 %v318
      %979 = vmatprep.subr.mxu0 0.0
      %980 = vmatpush1.msra.mxu0 %v309
      %981 = vmatprep.subr.mxu0 0.0
      %982 = vmatpush1.msra.mxu0 %v300
      %983 = vmatprep.subr.mxu0 0.0
      %984 = vmatpush1.msra.mxu0 %v291
      %985 = vmatprep.subr.mxu0 0.0
      %986 = vmatpush1.msra.mxu0 %v282
      %987 = vmatprep.subr.mxu0 0.0
      %988 = vmatpush1.msra.mxu0 %v273
      %989 = vmatprep.subr.mxu0 0.0
      %990 = vmatpush2.msra.mxu0 0.0
      %991 = vmatprep.subr.mxu0 0.0
      %992 = vmatpush2.msra.mxu0 0.0
      %993 = vmatprep.subr.mxu0 0.0
      %994 = vmatpush2.msra.mxu0 0.0
      %995 = vmatprep.subr.mxu0 0.0
      %996 = vmatpush2.msra.mxu0 0.0
      %997 = vmatprep.subr.mxu0 0.0
      %998 = vmatpush2.msra.mxu0 0.0
      %999 = vmatprep.subr.mxu0 0.0
      %1000 = vmatpush2.msra.mxu0 0.0
      %1001 = vmatprep.subr.mxu0 0.0
      %1002 = vmatpush2.msra.mxu0 0.0
      %1003 = vmatprep.subr.mxu0 0.0
      %1004 = vmatpush2.msra.mxu0 0.0
      %1005 = vmatprep.subr.mxu0 0.0
      %1006 = vmatpush2.msra.mxu0 0.0
      %1007 = vmatprep.subr.mxu0 0.0
      %1008 = vmatpush2.msra.mxu0 0.0
      %1009 = vmatprep.subr.mxu0 0.0
      %1010 = vmatpush2.msra.mxu0 0.0
      %1011 = vmatprep.subr.mxu0 0.0
      %1012 = vmatpush2.msra.mxu0 0.0
      %1013 = vmatprep.subr.mxu0 0.0
      %1014 = vmatpush2.msra.mxu0 0.0
      %1015 = vmatprep.subr.mxu0 0.0
      %1016 = vmatpush2.msra.mxu0 0.0
      %1017 = vmatprep.subr.mxu0 0.0
      %1018 = vmatpush2.msra.mxu0 0.0
      %1019 = vmatprep.subr.mxu0 0.0
      %1020 = vmatpush2.msra.mxu0 0.0
      %1021 = vmatprep.mubr.f32.mxu0 0.0
      %1022 = vmatmul.mubr.f32.gmra.mxu0 %v253
      %v1023 = vpop.f32.mrf.mxu0
      %v1024 = vadd.f32 0.0, %v1023
      %v1025 = vpop.f32.mrf.mxu0
      %1026 = vmatprep.mubr.f32.mxu0 0.0
      %1027 = vmatmul.mubr.f32.gmra.mxu0 %v254
      %v1028 = vpop.f32.mrf.mxu0
      %v1029 = vadd.f32 0.0, %v1028
      %v1030 = vpop.f32.mrf.mxu0
      %1031 = vmatprep.mubr.f32.mxu0 0.0
      %1032 = vmatmul.mubr.f32.gmra.mxu0 %v255
      %v1033 = vpop.f32.mrf.mxu0
      %v1034 = vadd.f32 0.0, %v1033
      %v1035 = vpop.f32.mrf.mxu0
      %1036 = vmatprep.mubr.f32.mxu0 0.0
      %1037 = vmatmul.mubr.f32.gmra.mxu0 %v256
      %v1038 = vpop.f32.mrf.mxu0
      %v1039 = vadd.f32 0.0, %v1038
      %v1040 = vpop.f32.mrf.mxu0
      %1041 = vmatprep.mubr.f32.mxu0 0.0
      %1042 = vmatmul.mubr.f32.gmra.mxu0 %v257
      %v1043 = vpop.f32.mrf.mxu0
      %v1044 = vadd.f32 0.0, %v1043
      %v1045 = vpop.f32.mrf.mxu0
      %1046 = vmatprep.mubr.f32.mxu0 0.0
      %1047 = vmatmul.mubr.f32.gmra.mxu0 %v258
      %v1048 = vpop.f32.mrf.mxu0
      %v1049 = vadd.f32 0.0, %v1048
      %v1050 = vpop.f32.mrf.mxu0
      %1051 = vmatprep.mubr.f32.mxu0 0.0
      %1052 = vmatmul.mubr.f32.gmra.mxu0 %v259
      %v1053 = vpop.f32.mrf.mxu0
      %v1054 = vadd.f32 0.0, %v1053
      %v1055 = vpop.f32.mrf.mxu0
      %1056 = vmatprep.mubr.f32.mxu0 0.0
      %1057 = vmatmul.mubr.f32.gmra.mxu0 %v260
      %v1058 = vpop.f32.mrf.mxu0
      %v1059 = vadd.f32 0.0, %v1058
      %v1060 = vpop.f32.mrf.mxu0
      %1061 = vmatprep.mubr.f32.mxu0 0.0
      %1062 = vmatmul.mubr.f32.gmra.mxu0 %v261
      %v1063 = vpop.f32.mrf.mxu0
      %v1064 = vadd.f32 0.0, %v1063
      %v1065 = vpop.f32.mrf.mxu0
      %1066 = vmatprep.mubr.f32.mxu0 0.0
      %1067 = vmatmul.mubr.f32.gmra.mxu0 %v262
      %v1068 = vpop.f32.mrf.mxu0
      %v1069 = vadd.f32 0.0, %v1068
      %v1070 = vpop.f32.mrf.mxu0
      %1071 = vmatprep.mubr.f32.mxu0 0.0
      %1072 = vmatmul.mubr.f32.gmra.mxu0 %v263
      %v1073 = vpop.f32.mrf.mxu0
      %v1074 = vadd.f32 0.0, %v1073
      %v1075 = vpop.f32.mrf.mxu0
      %1076 = vmatprep.mubr.f32.mxu0 0.0
      %1077 = vmatmul.mubr.f32.gmra.mxu0 %v264
      %v1078 = vpop.f32.mrf.mxu0
      %v1079 = vadd.f32 0.0, %v1078
      %v1080 = vpop.f32.mrf.mxu0
      %1081 = vdwg.mxu0
      %1082 = vst [vmem:[%s201] sm:$0xff] %v476
      %1083 = vst [vmem:[%s201 + $0x8] sm:$0xff] %v478
      %1084 = vst [vmem:[%s201 + $0x10] sm:$0xff] %v613
      %1085 = vst [vmem:[%s201 + $0x18] sm:$0xff] %v615
      %1086 = vst [vmem:[%s201 + $0x20] sm:$0xff] %v750
      %1087 = vst [vmem:[%s201 + $0x28] sm:$0xff] %v752
      %1088 = vst [vmem:[%s201 + $0x30] sm:$0xff] %v887
      %1089 = vst [vmem:[%s201 + $0x38] sm:$0xff] %v889
      %1090 = vst [vmem:[%s201 + $0x40] sm:$0xff] %v1024
      %1091 = vst [vmem:[%s201 + $0x48] sm:$0xff] %v482
      %1092 = vst [vmem:[%s201 + $0x50] sm:$0xff] %v484
      %1093 = vst [vmem:[%s201 + $0x58] sm:$0xff] %v619
      %1094 = vst [vmem:[%s201 + $0x60] sm:$0xff] %v621
      %1095 = vst [vmem:[%s201 + $0x68] sm:$0xff] %v756
      %1096 = vst [vmem:[%s201 + $0x70] sm:$0xff] %v758
      %1097 = vst [vmem:[%s201 + $0x78] sm:$0xff] %v893
      %1098 = vst [vmem:[%s201 + $0x80] sm:$0xff] %v895
      %1099 = vst [vmem:[%s201 + $0x88] sm:$0xff] %v1029
      %1100 = vst [vmem:[%s201 + $0x90] sm:$0xff] %v488
      %1101 = vst [vmem:[%s201 + $0x98] sm:$0xff] %v490
      %1102 = vst [vmem:[%s201 + $0xa0] sm:$0xff] %v625
      %1103 = vst [vmem:[%s201 + $0xa8] sm:$0xff] %v627
      %1104 = vst [vmem:[%s201 + $0xb0] sm:$0xff] %v762
      %1105 = vst [vmem:[%s201 + $0xb8] sm:$0xff] %v764
      %1106 = vst [vmem:[%s201 + $0xc0] sm:$0xff] %v899
      %1107 = vst [vmem:[%s201 + $0xc8] sm:$0xff] %v901
      %1108 = vst [vmem:[%s201 + $0xd0] sm:$0xff] %v1034
      %1109 = vst [vmem:[%s201 + $0xd8] sm:$0xff] %v494
      %1110 = vst [vmem:[%s201 + $0xe0] sm:$0xff] %v496
      %1111 = vst [vmem:[%s201 + $0xe8] sm:$0xff] %v631
      %1112 = vst [vmem:[%s201 + $0xf0] sm:$0xff] %v633
      %1113 = vst [vmem:[%s201 + $0xf8] sm:$0xff] %v768
      %1114 = vst [vmem:[%s201 + $0x100] sm:$0xff] %v770
      %1115 = vst [vmem:[%s201 + $0x108] sm:$0xff] %v905
      %1116 = vst [vmem:[%s201 + $0x110] sm:$0xff] %v907
      %1117 = vst [vmem:[%s201 + $0x118] sm:$0xff] %v1039
      %1118 = vst [vmem:[%s201 + $0x120] sm:$0xff] %v500
      %1119 = vst [vmem:[%s201 + $0x128] sm:$0xff] %v502
      %1120 = vst [vmem:[%s201 + $0x130] sm:$0xff] %v637
      %1121 = vst [vmem:[%s201 + $0x138] sm:$0xff] %v639
      %1122 = vst [vmem:[%s201 + $0x140] sm:$0xff] %v774
      %1123 = vst [vmem:[%s201 + $0x148] sm:$0xff] %v776
      %1124 = vst [vmem:[%s201 + $0x150] sm:$0xff] %v911
      %1125 = vst [vmem:[%s201 + $0x158] sm:$0xff] %v913
      %1126 = vst [vmem:[%s201 + $0x160] sm:$0xff] %v1044
      %1127 = vst [vmem:[%s201 + $0x168] sm:$0xff] %v506
      %1128 = vst [vmem:[%s201 + $0x170] sm:$0xff] %v508
      %1129 = vst [vmem:[%s201 + $0x178] sm:$0xff] %v643
      %1130 = vst [vmem:[%s201 + $0x180] sm:$0xff] %v645
      %1131 = vst [vmem:[%s201 + $0x188] sm:$0xff] %v780
      %1132 = vst [vmem:[%s201 + $0x190] sm:$0xff] %v782
      %1133 = vst [vmem:[%s201 + $0x198] sm:$0xff] %v917
      %1134 = vst [vmem:[%s201 + $0x1a0] sm:$0xff] %v919
      %1135 = vst [vmem:[%s201 + $0x1a8] sm:$0xff] %v1049
      %1136 = vst [vmem:[%s201 + $0x1b0] sm:$0xff] %v512
      %1137 = vst [vmem:[%s201 + $0x1b8] sm:$0xff] %v514
      %1138 = vst [vmem:[%s201 + $0x1c0] sm:$0xff] %v649
      %1139 = vst [vmem:[%s201 + $0x1c8] sm:$0xff] %v651
      %1140 = vst [vmem:[%s201 + $0x1d0] sm:$0xff] %v786
      %1141 = vst [vmem:[%s201 + $0x1d8] sm:$0xff] %v788
      %1142 = vst [vmem:[%s201 + $0x1e0] sm:$0xff] %v923
      %1143 = vst [vmem:[%s201 + $0x1e8] sm:$0xff] %v925
      %1144 = vst [vmem:[%s201 + $0x1f0] sm:$0xff] %v1054
      %1145 = vst [vmem:[%s201 + $0x1f8] sm:$0xff] %v518
      %1146 = vst [vmem:[%s201 + $0x200] sm:$0xff] %v520
      %1147 = vst [vmem:[%s201 + $0x208] sm:$0xff] %v655
      %1148 = vst [vmem:[%s201 + $0x210] sm:$0xff] %v657
      %1149 = vst [vmem:[%s201 + $0x218] sm:$0xff] %v792
      %1150 = vst [vmem:[%s201 + $0x220] sm:$0xff] %v794
      %1151 = vst [vmem:[%s201 + $0x228] sm:$0xff] %v929
      %1152 = vst [vmem:[%s201 + $0x230] sm:$0xff] %v931
      %1153 = vst [vmem:[%s201 + $0x238] sm:$0xff] %v1059
      %1154 = vst [vmem:[%s201 + $0x240] sm:$0xff] %v524
      %1155 = vst [vmem:[%s201 + $0x248] sm:$0xff] %v526
      %1156 = vst [vmem:[%s201 + $0x250] sm:$0xff] %v661
      %1157 = vst [vmem:[%s201 + $0x258] sm:$0xff] %v663
      %1158 = vst [vmem:[%s201 + $0x260] sm:$0xff] %v798
      %1159 = vst [vmem:[%s201 + $0x268] sm:$0xff] %v800
      %1160 = vst [vmem:[%s201 + $0x270] sm:$0xff] %v935
      %1161 = vst [vmem:[%s201 + $0x278] sm:$0xff] %v937
      %1162 = vst [vmem:[%s201 + $0x280] sm:$0xff] %v1064
      %1163 = vst [vmem:[%s201 + $0x288] sm:$0xff] %v530
      %1164 = vst [vmem:[%s201 + $0x290] sm:$0xff] %v532
      %1165 = vst [vmem:[%s201 + $0x298] sm:$0xff] %v667
      %1166 = vst [vmem:[%s201 + $0x2a0] sm:$0xff] %v669
      %1167 = vst [vmem:[%s201 + $0x2a8] sm:$0xff] %v804
      %1168 = vst [vmem:[%s201 + $0x2b0] sm:$0xff] %v806
      %1169 = vst [vmem:[%s201 + $0x2b8] sm:$0xff] %v941
      %1170 = vst [vmem:[%s201 + $0x2c0] sm:$0xff] %v943
      %1171 = vst [vmem:[%s201 + $0x2c8] sm:$0xff] %v1069
      %1172 = vst [vmem:[%s201 + $0x2d0] sm:$0xff] %v536
      %1173 = vst [vmem:[%s201 + $0x2d8] sm:$0xff] %v538
      %1174 = vst [vmem:[%s201 + $0x2e0] sm:$0xff] %v673
      %1175 = vst [vmem:[%s201 + $0x2e8] sm:$0xff] %v675
      %1176 = vst [vmem:[%s201 + $0x2f0] sm:$0xff] %v810
      %1177 = vst [vmem:[%s201 + $0x2f8] sm:$0xff] %v812
      %1178 = vst [vmem:[%s201 + $0x300] sm:$0xff] %v947
      %1179 = vst [vmem:[%s201 + $0x308] sm:$0xff] %v949
      %1180 = vst [vmem:[%s201 + $0x310] sm:$0xff] %v1074
      %1181 = vst [vmem:[%s201 + $0x318] sm:$0xff] %v542
      %1182 = vst [vmem:[%s201 + $0x320] sm:$0xff] %v544
      %1183 = vst [vmem:[%s201 + $0x328] sm:$0xff] %v679
      %1184 = vst [vmem:[%s201 + $0x330] sm:$0xff] %v681
      %1185 = vst [vmem:[%s201 + $0x338] sm:$0xff] %v816
      %1186 = vst [vmem:[%s201 + $0x340] sm:$0xff] %v818
      %1187 = vst [vmem:[%s201 + $0x348] sm:$0xff] %v953
      %1188 = vst [vmem:[%s201 + $0x350] sm:$0xff] %v955
      %1189 = vst [vmem:[%s201 + $0x358] sm:$0xff] %v1079
      %s1190 = smul.u32 12, %s15
      %p1191 = scmp.lt.s32.totalorder %s1190, 95
      %s1192 = scalar_select %p1191, %s1190, 95
      %s1193 = smul.addr %s1192, 9
      %s1194 = smul.addr %s1193, 8
      %s1195 = scalar_lea.vmem %s4, %s1194
      // Predicated region
      $region37: #{residual_block_forward.3} parent=35 // pred_check
        %p1196 = pneg %p122
      $region38: #{residual_block_forward.3} parent=35 // pred_check_branch
        %1198 = sbr.rel (%p1196) target = $region40
      $region39: #{residual_block_forward.3} parent=35 // pred_region
        %s1199 = smul.u32 12, %s15
      $region40: #{residual_block_forward.3} parent=35 // pred_fallthru
        _
    $region36: #{residual_block_forward.3} parent=5 // pred_fallthru
      _
    %p1200 = scmp.le.s32.totalorder 2, %s10
    // Predicated region
    $region41: #{residual_block_forward.3} parent=5 // pred_check
      %p1201 = pneg %p1200
    $region42: #{residual_block_forward.3} parent=5 // pred_check_branch
      %1203 = sbr.rel (%p1201) target = $region44
    $region43: #{residual_block_forward.3} parent=5 // pred_region
      %s1204 = ssub.s32 %s10, 2
      // Predicated region
      $region45: #{residual_block_forward.3} parent=43 // pred_check
        %p1205 = pneg %p128
      $region46: #{residual_block_forward.3} parent=43 // pred_check_branch
        %1207 = sbr.rel (%p1205) target = $region48
      $region47: #{residual_block_forward.3} parent=43 // pred_region
        %s1208 = smul.u32 12, %s16
        %p1209 = scmp.lt.s32.totalorder %s1208, 95
        %s1210 = scalar_select %p1209, %s1208, 95
        %s1211 = smul.addr %s1210, 9
        %s1212 = smul.addr %s1211, 8
        %s1213 = scalar_lea.vmem %s4, %s1212
      $region48: #{residual_block_forward.3} parent=43 // pred_fallthru
        _
    $region44: #{residual_block_forward.3} parent=5 // pred_fallthru
      _
  $region6: #{residual_block_forward.3} parent=0 // loop_footer
    %s14 = sadd.s32 1, %s10
  $region7: #{residual_block_forward.3} parent=0 // loop_footer_branch
    %9 = sbr.rel target = $region3
  $region8: #{residual_block_forward.3} parent=0 // loop_exit
    _

</llo_original>
